<compile_context>
chip_gen: v6e
topology: v6e:2x2x1
jax: 0.10.0
libtpu: 0.0.40
codegen_flags: <defaults>
</compile_context>

<pallas_src>
import functools

import jax
import jax.numpy as jnp
from jax.experimental import pallas as pl
from jax.experimental.pallas import tpu as pltpu


# ----------------------------------------------------------------------------
# Fused kernel: embedding lookup + 1-layer encoder (both Siamese branches of a
# batch block) + CLS-query attention + Siamese head.
# ----------------------------------------------------------------------------
def siamese_fused_kernel(ids1_ref, ids2_ref, m1_ref, m2_ref, lbl_ref,
                         emb_ref, pos_ref,
                         wq_ref, wk_ref, wv_ref, wo_ref,
                         ln1g_ref, ln1b_ref,
                         w1_ref, b1_ref, w2_ref, b2_ref,
                         ln2g_ref, ln2b_ref,
                         out_ref, *, loss_type, margin):
    f32 = jnp.float32
    Bblk, S = ids1_ref.shape          # examples in this grid block, seq len
    V, H = emb_ref.shape              # vocab, hidden
    two_b = 2 * Bblk                  # both Siamese branches fused on rows
    R = two_b * S                     # total token rows in this block

    # ---- in-kernel embedding lookup (one-hot matmul on the MXU, no gather) --
    ids = jnp.concatenate([ids1_ref[...], ids2_ref[...]], axis=0)        # (2Bb,S) i32
    onehot = (ids[:, :, None] ==
              jax.lax.broadcasted_iota(jnp.int32, (two_b, S, V), 2)).astype(f32)
    x2d = jnp.dot(onehot.reshape(R, V), emb_ref[...],
                  preferred_element_type=f32)                            # (R,H)
    x3 = x2d.reshape(two_b, S, H) + pos_ref[...][None, :, :]             # + pos
    x2d = x3.reshape(R, H)
    x0 = x3[:, 0, :]                                                     # CLS rows (2Bb,H)

    # ---- projections: q only for the CLS query, K/V for all tokens ----------
    q0 = jnp.dot(x0, wq_ref[...], preferred_element_type=f32)            # (2Bb,H)
    k2d = jnp.dot(x2d, wk_ref[...], preferred_element_type=f32)          # (R,H)
    v2d = jnp.dot(x2d, wv_ref[...], preferred_element_type=f32)          # (R,H)

    # ---- CLS-query attention as one flat matmul + block-diag / padding mask -
    scale = jax.lax.rsqrt(f32(H))
    scores = jax.lax.dot_general(q0, k2d, (((1,), (1,)), ((), ())),
                                 preferred_element_type=f32) * scale     # (2Bb,R)
    row = jax.lax.broadcasted_iota(jnp.int32, (two_b, R), 0)
    col = jax.lax.broadcasted_iota(jnp.int32, (two_b, R), 1)
    blockdiag = jnp.logical_and(col >= row * S, col < row * S + S).astype(f32)
    maskcat = jnp.concatenate([m1_ref[...], m2_ref[...]], axis=0).astype(f32)
    padmask = jnp.concatenate([maskcat] * two_b, axis=1)                 # (2Bb,R)
    valid = blockdiag * padmask            # off-diagonal blocks killed anyway
    scores = scores + (valid - 1.0) * f32(1e9)

    # softmax (EUP exp + approx reciprocal; XLU lane reductions)
    scores = scores - jnp.max(scores, axis=-1, keepdims=True)
    p = jnp.exp(scores)
    p = p * pl.reciprocal(jnp.sum(p, axis=-1, keepdims=True), approx=True)

    attn0 = jnp.dot(p, v2d, preferred_element_type=f32)                  # (2Bb,H)
    attn0 = jnp.dot(attn0, wo_ref[...], preferred_element_type=f32)

    # ---- residual + layernorm 1 ---------------------------------------------
    h = x0 + attn0
    mu = jnp.mean(h, axis=-1, keepdims=True)
    var = jnp.mean((h - mu) ** 2, axis=-1, keepdims=True)
    h = (h - mu) * jax.lax.rsqrt(var + 1e-5) * ln1g_ref[...] + ln1b_ref[...]

    # ---- feed-forward ---------------------------------------------------------
    f = jnp.dot(h, w1_ref[...], preferred_element_type=f32) + b1_ref[...]
    f = jax.nn.gelu(f, approximate=True)
    f = jnp.dot(f, w2_ref[...], preferred_element_type=f32) + b2_ref[...]

    # ---- residual + layernorm 2 ----------------------------------------------
    h2 = h + f
    mu2 = jnp.mean(h2, axis=-1, keepdims=True)
    var2 = jnp.mean((h2 - mu2) ** 2, axis=-1, keepdims=True)
    cls = (h2 - mu2) * jax.lax.rsqrt(var2 + 1e-5) * ln2g_ref[...] + ln2b_ref[...]

    c1 = cls[:Bblk, :]                 # branch-1 CLS embeddings (Bblk,H)
    c2 = cls[Bblk:, :]                 # branch-2 CLS embeddings (Bblk,H)
    lbl = lbl_ref[...].astype(f32)     # (Bblk,1)

    # ---- Siamese head (loss_type / margin are static) -------------------------
    if loss_type == "cosine":
        dot = jnp.sum(c1 * c2, axis=-1, keepdims=True)                   # (Bblk,1)
        n1 = jnp.sqrt(jnp.sum(c1 * c1, axis=-1, keepdims=True))
        n2 = jnp.sqrt(jnp.sum(c2 * c2, axis=-1, keepdims=True))
        # torch.F.cosine_similarity clamps the norm *product* to eps
        cos = dot / jnp.maximum(n1 * n2, f32(1e-8))
        sim = cos
        per = ((cos + 1.0) * 0.5 - lbl) ** 2                             # per-example MSE
    else:  # contrastive
        diff = c1 - c2 + f32(1e-6)     # F.pairwise_distance eps
        d = jnp.sqrt(jnp.sum(diff * diff, axis=-1, keepdims=True))
        hinge = jnp.maximum(f32(margin) - d, 0.0)
        per = (1.0 - lbl) * d * d + lbl * hinge * hinge
        sim = d

    # ---- lane-dense (OUT_ROWS,128) output tile: col0 = sim, col1 = loss ------
    out_rows = out_ref.shape[0]
    pad = jnp.zeros((out_rows - Bblk, 1), f32)
    sim_col = jnp.concatenate([sim, pad], axis=0)                        # (out_rows,1)
    per_col = jnp.concatenate([per, pad], axis=0)
    lane = jax.lax.broadcasted_iota(jnp.int32, (out_rows, 128), 1)
    out_ref[...] = jnp.where(lane == 0, sim_col,
                             jnp.where(lane == 1, per_col, f32(0.0)))


# ----------------------------------------------------------------------------
# Full SiameseNetwork forward: one pallas_call, trivial parallel grid over
# batch blocks (shards across v7x's two TensorCores, a cheap loop elsewhere).
# ----------------------------------------------------------------------------
def siamese_forward(params, input_ids1, attention_mask1,
                    input_ids2, attention_mask2, labels,
                    loss_type="cosine", margin=2.0):
    if loss_type not in ("cosine", "contrastive"):
        raise ValueError("Invalid loss_type specified.")

    B, S = input_ids1.shape
    V, H = params["emb"].shape
    F = params["w1"].shape[1]

    G = 2 if (B % 2 == 0 and B >= 2) else 1     # batch blocks (parallel grid axis)
    Bblk = B // G
    OUT_ROWS = max(8, ((Bblk + 7) // 8) * 8)

    # Only metadata reshapes in the wrapper; all math happens in the kernel.
    ids1 = input_ids1.reshape(G, Bblk, S).astype(jnp.int32)
    ids2 = input_ids2.reshape(G, Bblk, S).astype(jnp.int32)
    m1 = attention_mask1.reshape(G, Bblk, S).astype(jnp.int32)
    m2 = attention_mask2.reshape(G, Bblk, S).astype(jnp.int32)
    lbl = labels.astype(jnp.float32).reshape(G, Bblk, 1)
    pos = params["pos"][:S, :]

    def blk_spec(shape):                 # per-grid-block input (leading dim squeezed)
        return pl.BlockSpec((None,) + shape, lambda g: (g,) + (0,) * len(shape))

    def full_spec(shape):                # weights: whole array resident, fetched once
        return pl.BlockSpec(shape, lambda g: (0,) * len(shape))

    in_specs = [
        blk_spec((Bblk, S)), blk_spec((Bblk, S)),          # ids1, ids2
        blk_spec((Bblk, S)), blk_spec((Bblk, S)),          # mask1, mask2
        blk_spec((Bblk, 1)),                               # labels
        full_spec((V, H)), full_spec((S, H)),              # emb, pos
        full_spec((H, H)), full_spec((H, H)),              # wq, wk
        full_spec((H, H)), full_spec((H, H)),              # wv, wo
        full_spec((1, H)), full_spec((1, H)),              # ln1 g/b
        full_spec((H, F)), full_spec((1, F)),              # w1, b1
        full_spec((F, H)), full_spec((1, H)),              # w2, b2
        full_spec((1, H)), full_spec((1, H)),              # ln2 g/b
    ]
    out_spec = pl.BlockSpec((None, OUT_ROWS, 128), lambda g: (g, 0, 0))

    # Advisory cost estimate (helps XLA schedule neighbors around the call).
    R = 2 * Bblk * S
    m = 2 * Bblk
    flops_step = (2 * R * V * H            # embedding one-hot matmul
                  + 2 * (2 * R * H * H)    # K, V projections
                  + 2 * m * H * H          # CLS q projection
                  + 2 * m * R * H          # scores
                  + 2 * m * R * H          # attn @ V
                  + 2 * m * H * H          # output projection
                  + 4 * m * H * F)         # FFN
    transc_step = m * R + m * F + 8 * m
    bytes_acc = (4 * (2 * B * S * 2 + B)                              # ids/masks/labels
                 + 4 * sum(int(v.size) for v in params.values())      # weights
                 + 4 * G * OUT_ROWS * 128)                            # output
    cost = pl.CostEstimate(flops=int(G * flops_step),
                           transcendentals=int(G * transc_step),
                           bytes_accessed=int(bytes_acc))

    kern = functools.partial(siamese_fused_kernel,
                             loss_type=loss_type, margin=margin)

    out = pl.pallas_call(
        kern,
        out_shape=jax.ShapeDtypeStruct((G, OUT_ROWS, 128), jnp.float32),
        grid_spec=pltpu.PrefetchScalarGridSpec(
            num_scalar_prefetch=0,
            grid=(G,),
            in_specs=in_specs,
            out_specs=out_spec,
        ),
        compiler_params=pltpu.CompilerParams(
            dimension_semantics=("parallel",),
            vmem_limit_bytes=32 * 1024 * 1024),
        cost_estimate=cost,
    )(ids1, ids2, m1, m2, lbl,
      params["emb"], pos,
      params["wq"], params["wk"], params["wv"], params["wo"],
      params["ln1_g"], params["ln1_b"],
      params["w1"], params["b1"], params["w2"], params["b2"],
      params["ln2_g"], params["ln2_b"])

    sim = out[:, :Bblk, 0].reshape(B)
    loss = jnp.mean(out[:, :Bblk, 1])      # mean over B per-example losses
    return loss, sim


def init_params(key, vocab=64, max_seq=8, hidden=32, ffn=64):
    ks = jax.random.split(key, 8)
    s = 0.02
    return {
        "emb":  s * jax.random.normal(ks[0], (vocab, hidden), jnp.float32),
        "pos":  s * jax.random.normal(ks[1], (max_seq, hidden), jnp.float32),
        "wq":   s * jax.random.normal(ks[2], (hidden, hidden), jnp.float32),
        "wk":   s * jax.random.normal(ks[3], (hidden, hidden), jnp.float32),
        "wv":   s * jax.random.normal(ks[4], (hidden, hidden), jnp.float32),
        "wo":   s * jax.random.normal(ks[5], (hidden, hidden), jnp.float32),
        "ln1_g": jnp.ones((1, hidden), jnp.float32),
        "ln1_b": jnp.zeros((1, hidden), jnp.float32),
        "w1":   s * jax.random.normal(ks[6], (hidden, ffn), jnp.float32),
        "b1":   jnp.zeros((1, ffn), jnp.float32),
        "w2":   s * jax.random.normal(ks[7], (ffn, hidden), jnp.float32),
        "b2":   jnp.zeros((1, hidden), jnp.float32),
        "ln2_g": jnp.ones((1, hidden), jnp.float32),
        "ln2_b": jnp.zeros((1, hidden), jnp.float32),
    }


if __name__ == "__main__":
    B, S, H, FFN, V = 2, 8, 32, 64, 64

    key = jax.random.PRNGKey(0)
    kp, k1, k2, km = jax.random.split(key, 4)
    params = init_params(kp, vocab=V, max_seq=S, hidden=H, ffn=FFN)

    input_ids1 = jax.random.randint(k1, (B, S), 0, V, dtype=jnp.int32)
    input_ids2 = jax.random.randint(k2, (B, S), 0, V, dtype=jnp.int32)
    attention_mask1 = jnp.ones((B, S), jnp.int32)
    # mask out last two tokens of the second sequence to exercise masking
    attention_mask2 = jnp.concatenate(
        [jnp.ones((B, S - 2), jnp.int32), jnp.zeros((B, 2), jnp.int32)], axis=1)
    labels = jnp.array([1.0, 0.0], jnp.float32)

    fwd = jax.jit(functools.partial(siamese_forward, loss_type="cosine"))
    loss, cosine_sim = fwd(params, input_ids1, attention_mask1,
                           input_ids2, attention_mask2, labels)
    jax.block_until_ready((loss, cosine_sim))
    assert loss.shape == () and cosine_sim.shape == (B,)
    assert bool(jnp.isfinite(loss)) and bool(jnp.all(jnp.isfinite(cosine_sim)))

    # also exercise the contrastive branch once
    fwd_c = jax.jit(functools.partial(siamese_forward,
                                      loss_type="contrastive", margin=2.0))
    loss_c, dist = fwd_c(params, input_ids1, attention_mask1,
                         input_ids2, attention_mask2, labels)
    jax.block_until_ready((loss_c, dist))
    assert bool(jnp.isfinite(loss_c)) and bool(jnp.all(jnp.isfinite(dist)))

    print("KERNEL_OK")
</pallas_src>

<mosaic_0001>
module attributes {stable_mosaic.version = 11 : i64} {
  func.func @siamese_fused_kernel(%arg0: i32, %arg1: memref<1x1x8xi32, #tpu.memory_space<vmem>>, %arg2: memref<1x1x8xi32, #tpu.memory_space<vmem>>, %arg3: memref<1x1x8xi32, #tpu.memory_space<vmem>>, %arg4: memref<1x1x8xi32, #tpu.memory_space<vmem>>, %arg5: memref<1x1x1xf32, #tpu.memory_space<vmem>>, %arg6: memref<64x32xf32, #tpu.memory_space<vmem>>, %arg7: memref<8x32xf32, #tpu.memory_space<vmem>>, %arg8: memref<32x32xf32, #tpu.memory_space<vmem>>, %arg9: memref<32x32xf32, #tpu.memory_space<vmem>>, %arg10: memref<32x32xf32, #tpu.memory_space<vmem>>, %arg11: memref<32x32xf32, #tpu.memory_space<vmem>>, %arg12: memref<1x32xf32, #tpu.memory_space<vmem>>, %arg13: memref<1x32xf32, #tpu.memory_space<vmem>>, %arg14: memref<32x64xf32, #tpu.memory_space<vmem>>, %arg15: memref<1x64xf32, #tpu.memory_space<vmem>>, %arg16: memref<64x32xf32, #tpu.memory_space<vmem>>, %arg17: memref<1x32xf32, #tpu.memory_space<vmem>>, %arg18: memref<1x32xf32, #tpu.memory_space<vmem>>, %arg19: memref<1x32xf32, #tpu.memory_space<vmem>>, %arg20: memref<1x8x128xf32, #tpu.memory_space<vmem>>) attributes {dimension_semantics = [#tpu.dimension_semantics<parallel>], iteration_bounds = array<i64: 2>, scalar_prefetch = 0 : i64, scratch_operands = 0 : i64, tpu.core_type = #tpu.core_type<tc>, window_params = [{transform_indices = @transform_0, window_bounds = array<i64: 1, 1, 8>}, {transform_indices = @transform_1, window_bounds = array<i64: 1, 1, 8>}, {transform_indices = @transform_2, window_bounds = array<i64: 1, 1, 8>}, {transform_indices = @transform_3, window_bounds = array<i64: 1, 1, 8>}, {transform_indices = @transform_4, window_bounds = array<i64: 1, 1, 1>}, {pipeline_mode = #tpu.pipeline_mode<synchronous>, transform_indices = @transform_5, window_bounds = array<i64: 64, 32>}, {pipeline_mode = #tpu.pipeline_mode<synchronous>, transform_indices = @transform_6, window_bounds = array<i64: 8, 32>}, {pipeline_mode = #tpu.pipeline_mode<synchronous>, transform_indices = @transform_7, window_bounds = array<i64: 32, 32>}, {pipeline_mode = #tpu.pipeline_mode<synchronous>, transform_indices = @transform_8, window_bounds = array<i64: 32, 32>}, {pipeline_mode = #tpu.pipeline_mode<synchronous>, transform_indices = @transform_9, window_bounds = array<i64: 32, 32>}, {pipeline_mode = #tpu.pipeline_mode<synchronous>, transform_indices = @transform_10, window_bounds = array<i64: 32, 32>}, {pipeline_mode = #tpu.pipeline_mode<synchronous>, transform_indices = @transform_11, window_bounds = array<i64: 1, 32>}, {pipeline_mode = #tpu.pipeline_mode<synchronous>, transform_indices = @transform_12, window_bounds = array<i64: 1, 32>}, {pipeline_mode = #tpu.pipeline_mode<synchronous>, transform_indices = @transform_13, window_bounds = array<i64: 32, 64>}, {pipeline_mode = #tpu.pipeline_mode<synchronous>, transform_indices = @transform_14, window_bounds = array<i64: 1, 64>}, {pipeline_mode = #tpu.pipeline_mode<synchronous>, transform_indices = @transform_15, window_bounds = array<i64: 64, 32>}, {pipeline_mode = #tpu.pipeline_mode<synchronous>, transform_indices = @transform_16, window_bounds = array<i64: 1, 32>}, {pipeline_mode = #tpu.pipeline_mode<synchronous>, transform_indices = @transform_17, window_bounds = array<i64: 1, 32>}, {pipeline_mode = #tpu.pipeline_mode<synchronous>, transform_indices = @transform_18, window_bounds = array<i64: 1, 32>}, {transform_indices = @transform_19, window_bounds = array<i64: 1, 8, 128>}]} {
    %c0 = arith.constant 0 : index
    %c0_0 = arith.constant 0 : index
    %c0_1 = arith.constant 0 : index
    %0 = vector.load %arg1[%c0, %c0_0, %c0_1] : memref<1x1x8xi32, #tpu.memory_space<vmem>>, vector<1x1x8xi32>
    %1 = vector.shape_cast %0 : vector<1x1x8xi32> to vector<1x8xi32>
    %c0_2 = arith.constant 0 : index
    %c0_3 = arith.constant 0 : index
    %c0_4 = arith.constant 0 : index
    %2 = vector.load %arg2[%c0_2, %c0_3, %c0_4] : memref<1x1x8xi32, #tpu.memory_space<vmem>>, vector<1x1x8xi32>
    %3 = vector.shape_cast %2 : vector<1x1x8xi32> to vector<1x8xi32>
    %4 = tpu.concatenate %1, %3 in 0 : vector<1x8xi32>, vector<1x8xi32> -> vector<2x8xi32>
    %5 = vector.shape_cast %4 : vector<2x8xi32> to vector<2x8x1xi32>
    %6 = tpu.iota {dimensions = array<i32: 2>} : vector<2x8x64xi32>
    %7 = vector.broadcast %5 : vector<2x8x1xi32> to vector<2x8x64xi32>
    %8 = arith.cmpi eq, %7, %6 : vector<2x8x64xi32>
    %9 = arith.extui %8 : vector<2x8x64xi1> to vector<2x8x64xi32>
    %10 = arith.sitofp %9 : vector<2x8x64xi32> to vector<2x8x64xf32>
    %11 = vector.shape_cast %10 : vector<2x8x64xf32> to vector<16x64xf32>
    %c0_5 = arith.constant 0 : index
    %c0_6 = arith.constant 0 : index
    %12 = vector.load %arg6[%c0_5, %c0_6] : memref<64x32xf32, #tpu.memory_space<vmem>>, vector<64x32xf32>
    %cst = arith.constant dense<0.000000e+00> : vector<16x32xf32>
    %13 = tpu.matmul %11, %12, %cst {dimension_numbers = #tpu.dot_dimension_numbers<[1], [0], [0], [1], [0, 0, 1, 1], [], []>} : vector<16x64xf32>, vector<64x32xf32>, vector<16x32xf32> -> vector<16x32xf32>
    %14 = vector.shape_cast %13 : vector<16x32xf32> to vector<2x8x32xf32>
    %c0_7 = arith.constant 0 : index
    %c0_8 = arith.constant 0 : index
    %15 = vector.load %arg7[%c0_7, %c0_8] : memref<8x32xf32, #tpu.memory_space<vmem>>, vector<8x32xf32>
    %16 = vector.shape_cast %15 : vector<8x32xf32> to vector<1x8x32xf32>
    %17 = vector.broadcast %16 : vector<1x8x32xf32> to vector<2x8x32xf32>
    %18 = arith.addf %14, %17 : vector<2x8x32xf32>
    %19 = vector.shape_cast %18 : vector<2x8x32xf32> to vector<16x32xf32>
    %20 = vector.extract_strided_slice %18 {offsets = [0, 0, 0], sizes = [2, 1, 32], strides = [1, 1, 1]} : vector<2x8x32xf32> to vector<2x1x32xf32>
    %21 = vector.shape_cast %20 : vector<2x1x32xf32> to vector<2x32xf32>
    %c0_9 = arith.constant 0 : index
    %c0_10 = arith.constant 0 : index
    %22 = vector.load %arg8[%c0_9, %c0_10] : memref<32x32xf32, #tpu.memory_space<vmem>>, vector<32x32xf32>
    %cst_11 = arith.constant dense<0.000000e+00> : vector<2x32xf32>
    %23 = tpu.matmul %21, %22, %cst_11 {dimension_numbers = #tpu.dot_dimension_numbers<[1], [0], [0], [1], [0, 0, 1, 1], [], []>} : vector<2x32xf32>, vector<32x32xf32>, vector<2x32xf32> -> vector<2x32xf32>
    %c0_12 = arith.constant 0 : index
    %c0_13 = arith.constant 0 : index
    %24 = vector.load %arg9[%c0_12, %c0_13] : memref<32x32xf32, #tpu.memory_space<vmem>>, vector<32x32xf32>
    %cst_14 = arith.constant dense<0.000000e+00> : vector<16x32xf32>
    %25 = tpu.matmul %19, %24, %cst_14 {dimension_numbers = #tpu.dot_dimension_numbers<[1], [0], [0], [1], [0, 0, 1, 1], [], []>} : vector<16x32xf32>, vector<32x32xf32>, vector<16x32xf32> -> vector<16x32xf32>
    %c0_15 = arith.constant 0 : index
    %c0_16 = arith.constant 0 : index
    %26 = vector.load %arg10[%c0_15, %c0_16] : memref<32x32xf32, #tpu.memory_space<vmem>>, vector<32x32xf32>
    %cst_17 = arith.constant dense<0.000000e+00> : vector<16x32xf32>
    %27 = tpu.matmul %19, %26, %cst_17 {dimension_numbers = #tpu.dot_dimension_numbers<[1], [0], [0], [1], [0, 0, 1, 1], [], []>} : vector<16x32xf32>, vector<32x32xf32>, vector<16x32xf32> -> vector<16x32xf32>
    %cst_18 = arith.constant 3.200000e+01 : f32
    %28 = math.rsqrt %cst_18 : f32
    %cst_19 = arith.constant dense<0.000000e+00> : vector<2x16xf32>
    %29 = tpu.matmul %23, %25, %cst_19 {dimension_numbers = #tpu.dot_dimension_numbers<[1], [1], [0], [0], [0, 0, 1, 0], [], []>} : vector<2x32xf32>, vector<16x32xf32>, vector<2x16xf32> -> vector<2x16xf32>
    %30 = vector.broadcast %28 : f32 to vector<2x16xf32>
    %31 = arith.mulf %29, %30 : vector<2x16xf32>
    %32 = tpu.iota {dimensions = array<i32: 0>} : vector<2x16xi32>
    %33 = tpu.iota {dimensions = array<i32: 1>} : vector<2x16xi32>
    %c8_i32 = arith.constant 8 : i32
    %34 = vector.broadcast %c8_i32 : i32 to vector<2x16xi32>
    %35 = arith.muli %32, %34 : vector<2x16xi32>
    %36 = arith.cmpi sge, %33, %35 : vector<2x16xi32>
    %c8_i32_20 = arith.constant 8 : i32
    %37 = vector.broadcast %c8_i32_20 : i32 to vector<2x16xi32>
    %38 = arith.muli %32, %37 : vector<2x16xi32>
    %c8_i32_21 = arith.constant 8 : i32
    %39 = vector.broadcast %c8_i32_21 : i32 to vector<2x16xi32>
    %40 = arith.addi %38, %39 : vector<2x16xi32>
    %41 = arith.cmpi slt, %33, %40 : vector<2x16xi32>
    %42 = arith.andi %36, %41 : vector<2x16xi1>
    %43 = arith.extui %42 : vector<2x16xi1> to vector<2x16xi32>
    %44 = arith.sitofp %43 : vector<2x16xi32> to vector<2x16xf32>
    %c0_22 = arith.constant 0 : index
    %c0_23 = arith.constant 0 : index
    %c0_24 = arith.constant 0 : index
    %45 = vector.load %arg3[%c0_22, %c0_23, %c0_24] : memref<1x1x8xi32, #tpu.memory_space<vmem>>, vector<1x1x8xi32>
    %46 = vector.shape_cast %45 : vector<1x1x8xi32> to vector<1x8xi32>
    %c0_25 = arith.constant 0 : index
    %c0_26 = arith.constant 0 : index
    %c0_27 = arith.constant 0 : index
    %47 = vector.load %arg4[%c0_25, %c0_26, %c0_27] : memref<1x1x8xi32, #tpu.memory_space<vmem>>, vector<1x1x8xi32>
    %48 = vector.shape_cast %47 : vector<1x1x8xi32> to vector<1x8xi32>
    %49 = tpu.concatenate %46, %48 in 0 : vector<1x8xi32>, vector<1x8xi32> -> vector<2x8xi32>
    %50 = arith.sitofp %49 : vector<2x8xi32> to vector<2x8xf32>
    %51 = tpu.concatenate %50, %50 in 1 : vector<2x8xf32>, vector<2x8xf32> -> vector<2x16xf32>
    %52 = arith.mulf %44, %51 : vector<2x16xf32>
    %cst_28 = arith.constant 1.000000e+00 : f32
    %53 = vector.broadcast %cst_28 : f32 to vector<2x16xf32>
    %54 = arith.subf %52, %53 : vector<2x16xf32>
    %cst_29 = arith.constant 1.000000e+09 : f32
    %55 = vector.broadcast %cst_29 : f32 to vector<2x16xf32>
    %56 = arith.mulf %54, %55 : vector<2x16xf32>
    %57 = arith.addf %31, %56 : vector<2x16xf32>
    %cst_30 = arith.constant dense<0xFF800000> : vector<2xf32>
    %58 = vector.multi_reduction <maximumf>, %57, %cst_30 [1] : vector<2x16xf32> to vector<2xf32>
    %59 = vector.shape_cast %58 : vector<2xf32> to vector<2x1xf32>
    %60 = vector.broadcast %59 : vector<2x1xf32> to vector<2x16xf32>
    %61 = arith.subf %57, %60 : vector<2x16xf32>
    %62 = math.exp %61 : vector<2x16xf32>
    %cst_31 = arith.constant dense<0.000000e+00> : vector<2xf32>
    %63 = vector.multi_reduction <add>, %62, %cst_31 [1] : vector<2x16xf32> to vector<2xf32>
    %64 = vector.shape_cast %63 : vector<2xf32> to vector<2x1xf32>
    %65 = tpu.reciprocal %64 {approx = true} : vector<2x1xf32> -> vector<2x1xf32>
    %66 = vector.broadcast %65 : vector<2x1xf32> to vector<2x16xf32>
    %67 = arith.mulf %62, %66 : vector<2x16xf32>
    %cst_32 = arith.constant dense<0.000000e+00> : vector<2x32xf32>
    %68 = tpu.matmul %67, %27, %cst_32 {dimension_numbers = #tpu.dot_dimension_numbers<[1], [0], [0], [1], [0, 0, 1, 1], [], []>} : vector<2x16xf32>, vector<16x32xf32>, vector<2x32xf32> -> vector<2x32xf32>
    %c0_33 = arith.constant 0 : index
    %c0_34 = arith.constant 0 : index
    %69 = vector.load %arg11[%c0_33, %c0_34] : memref<32x32xf32, #tpu.memory_space<vmem>>, vector<32x32xf32>
    %cst_35 = arith.constant dense<0.000000e+00> : vector<2x32xf32>
    %70 = tpu.matmul %68, %69, %cst_35 {dimension_numbers = #tpu.dot_dimension_numbers<[1], [0], [0], [1], [0, 0, 1, 1], [], []>} : vector<2x32xf32>, vector<32x32xf32>, vector<2x32xf32> -> vector<2x32xf32>
    %71 = arith.addf %21, %70 : vector<2x32xf32>
    %cst_36 = arith.constant dense<0.000000e+00> : vector<2xf32>
    %72 = vector.multi_reduction <add>, %71, %cst_36 [1] : vector<2x32xf32> to vector<2xf32>
    %73 = vector.shape_cast %72 : vector<2xf32> to vector<2x1xf32>
    %cst_37 = arith.constant 3.200000e+01 : f32
    %74 = vector.broadcast %cst_37 : f32 to vector<2x1xf32>
    %75 = arith.divf %73, %74 : vector<2x1xf32>
    %76 = vector.broadcast %75 : vector<2x1xf32> to vector<2x32xf32>
    %77 = arith.subf %71, %76 : vector<2x32xf32>
    %78 = arith.mulf %77, %77 : vector<2x32xf32>
    %cst_38 = arith.constant dense<0.000000e+00> : vector<2xf32>
    %79 = vector.multi_reduction <add>, %78, %cst_38 [1] : vector<2x32xf32> to vector<2xf32>
    %80 = vector.shape_cast %79 : vector<2xf32> to vector<2x1xf32>
    %cst_39 = arith.constant 3.200000e+01 : f32
    %81 = vector.broadcast %cst_39 : f32 to vector<2x1xf32>
    %82 = arith.divf %80, %81 : vector<2x1xf32>
    %83 = vector.broadcast %75 : vector<2x1xf32> to vector<2x32xf32>
    %84 = arith.subf %71, %83 : vector<2x32xf32>
    %cst_40 = arith.constant 9.99999974E-6 : f32
    %85 = vector.broadcast %cst_40 : f32 to vector<2x1xf32>
    %86 = arith.addf %82, %85 : vector<2x1xf32>
    %87 = math.rsqrt %86 : vector<2x1xf32>
    %88 = vector.broadcast %87 : vector<2x1xf32> to vector<2x32xf32>
    %89 = arith.mulf %84, %88 : vector<2x32xf32>
    %c0_41 = arith.constant 0 : index
    %c0_42 = arith.constant 0 : index
    %90 = vector.load %arg12[%c0_41, %c0_42] : memref<1x32xf32, #tpu.memory_space<vmem>>, vector<1x32xf32>
    %91 = vector.broadcast %90 : vector<1x32xf32> to vector<2x32xf32>
    %92 = arith.mulf %89, %91 : vector<2x32xf32>
    %c0_43 = arith.constant 0 : index
    %c0_44 = arith.constant 0 : index
    %93 = vector.load %arg13[%c0_43, %c0_44] : memref<1x32xf32, #tpu.memory_space<vmem>>, vector<1x32xf32>
    %94 = vector.broadcast %93 : vector<1x32xf32> to vector<2x32xf32>
    %95 = arith.addf %92, %94 : vector<2x32xf32>
    %c0_45 = arith.constant 0 : index
    %c0_46 = arith.constant 0 : index
    %96 = vector.load %arg14[%c0_45, %c0_46] : memref<32x64xf32, #tpu.memory_space<vmem>>, vector<32x64xf32>
    %cst_47 = arith.constant dense<0.000000e+00> : vector<2x64xf32>
    %97 = tpu.matmul %95, %96, %cst_47 {dimension_numbers = #tpu.dot_dimension_numbers<[1], [0], [0], [1], [0, 0, 1, 1], [], []>} : vector<2x32xf32>, vector<32x64xf32>, vector<2x64xf32> -> vector<2x64xf32>
    %c0_48 = arith.constant 0 : index
    %c0_49 = arith.constant 0 : index
    %98 = vector.load %arg15[%c0_48, %c0_49] : memref<1x64xf32, #tpu.memory_space<vmem>>, vector<1x64xf32>
    %99 = vector.broadcast %98 : vector<1x64xf32> to vector<2x64xf32>
    %100 = arith.addf %97, %99 : vector<2x64xf32>
    %101 = arith.mulf %100, %100 : vector<2x64xf32>
    %102 = arith.mulf %100, %101 : vector<2x64xf32>
    %cst_50 = arith.constant 4.471500e-02 : f32
    %103 = vector.broadcast %cst_50 : f32 to vector<2x64xf32>
    %104 = arith.mulf %103, %102 : vector<2x64xf32>
    %105 = arith.addf %100, %104 : vector<2x64xf32>
    %cst_51 = arith.constant 0.797884583 : f32
    %106 = vector.broadcast %cst_51 : f32 to vector<2x64xf32>
    %107 = arith.mulf %106, %105 : vector<2x64xf32>
    %108 = math.tanh %107 : vector<2x64xf32>
    %cst_52 = arith.constant 1.000000e+00 : f32
    %109 = vector.broadcast %cst_52 : f32 to vector<2x64xf32>
    %110 = arith.addf %109, %108 : vector<2x64xf32>
    %cst_53 = arith.constant 5.000000e-01 : f32
    %111 = vector.broadcast %cst_53 : f32 to vector<2x64xf32>
    %112 = arith.mulf %111, %110 : vector<2x64xf32>
    %113 = arith.mulf %100, %112 : vector<2x64xf32>
    %c0_54 = arith.constant 0 : index
    %c0_55 = arith.constant 0 : index
    %114 = vector.load %arg16[%c0_54, %c0_55] : memref<64x32xf32, #tpu.memory_space<vmem>>, vector<64x32xf32>
    %cst_56 = arith.constant dense<0.000000e+00> : vector<2x32xf32>
    %115 = tpu.matmul %113, %114, %cst_56 {dimension_numbers = #tpu.dot_dimension_numbers<[1], [0], [0], [1], [0, 0, 1, 1], [], []>} : vector<2x64xf32>, vector<64x32xf32>, vector<2x32xf32> -> vector<2x32xf32>
    %c0_57 = arith.constant 0 : index
    %c0_58 = arith.constant 0 : index
    %116 = vector.load %arg17[%c0_57, %c0_58] : memref<1x32xf32, #tpu.memory_space<vmem>>, vector<1x32xf32>
    %117 = vector.broadcast %116 : vector<1x32xf32> to vector<2x32xf32>
    %118 = arith.addf %115, %117 : vector<2x32xf32>
    %119 = arith.addf %95, %118 : vector<2x32xf32>
    %cst_59 = arith.constant dense<0.000000e+00> : vector<2xf32>
    %120 = vector.multi_reduction <add>, %119, %cst_59 [1] : vector<2x32xf32> to vector<2xf32>
    %121 = vector.shape_cast %120 : vector<2xf32> to vector<2x1xf32>
    %cst_60 = arith.constant 3.200000e+01 : f32
    %122 = vector.broadcast %cst_60 : f32 to vector<2x1xf32>
    %123 = arith.divf %121, %122 : vector<2x1xf32>
    %124 = vector.broadcast %123 : vector<2x1xf32> to vector<2x32xf32>
    %125 = arith.subf %119, %124 : vector<2x32xf32>
    %126 = arith.mulf %125, %125 : vector<2x32xf32>
    %cst_61 = arith.constant dense<0.000000e+00> : vector<2xf32>
    %127 = vector.multi_reduction <add>, %126, %cst_61 [1] : vector<2x32xf32> to vector<2xf32>
    %128 = vector.shape_cast %127 : vector<2xf32> to vector<2x1xf32>
    %cst_62 = arith.constant 3.200000e+01 : f32
    %129 = vector.broadcast %cst_62 : f32 to vector<2x1xf32>
    %130 = arith.divf %128, %129 : vector<2x1xf32>
    %131 = vector.broadcast %123 : vector<2x1xf32> to vector<2x32xf32>
    %132 = arith.subf %119, %131 : vector<2x32xf32>
    %cst_63 = arith.constant 9.99999974E-6 : f32
    %133 = vector.broadcast %cst_63 : f32 to vector<2x1xf32>
    %134 = arith.addf %130, %133 : vector<2x1xf32>
    %135 = math.rsqrt %134 : vector<2x1xf32>
    %136 = vector.broadcast %135 : vector<2x1xf32> to vector<2x32xf32>
    %137 = arith.mulf %132, %136 : vector<2x32xf32>
    %c0_64 = arith.constant 0 : index
    %c0_65 = arith.constant 0 : index
    %138 = vector.load %arg18[%c0_64, %c0_65] : memref<1x32xf32, #tpu.memory_space<vmem>>, vector<1x32xf32>
    %139 = vector.broadcast %138 : vector<1x32xf32> to vector<2x32xf32>
    %140 = arith.mulf %137, %139 : vector<2x32xf32>
    %c0_66 = arith.constant 0 : index
    %c0_67 = arith.constant 0 : index
    %141 = vector.load %arg19[%c0_66, %c0_67] : memref<1x32xf32, #tpu.memory_space<vmem>>, vector<1x32xf32>
    %142 = vector.broadcast %141 : vector<1x32xf32> to vector<2x32xf32>
    %143 = arith.addf %140, %142 : vector<2x32xf32>
    %144 = vector.extract_strided_slice %143 {offsets = [0, 0], sizes = [1, 32], strides = [1, 1]} : vector<2x32xf32> to vector<1x32xf32>
    %145 = vector.extract_strided_slice %143 {offsets = [1, 0], sizes = [1, 32], strides = [1, 1]} : vector<2x32xf32> to vector<1x32xf32>
    %c0_68 = arith.constant 0 : index
    %c0_69 = arith.constant 0 : index
    %c0_70 = arith.constant 0 : index
    %146 = vector.load %arg5[%c0_68, %c0_69, %c0_70] : memref<1x1x1xf32, #tpu.memory_space<vmem>>, vector<1x1x1xf32>
    %147 = vector.shape_cast %146 : vector<1x1x1xf32> to vector<1x1xf32>
    %148 = arith.mulf %144, %145 : vector<1x32xf32>
    %cst_71 = arith.constant dense<0.000000e+00> : vector<1xf32>
    %149 = vector.multi_reduction <add>, %148, %cst_71 [1] : vector<1x32xf32> to vector<1xf32>
    %150 = vector.shape_cast %149 : vector<1xf32> to vector<1x1xf32>
    %151 = arith.mulf %144, %144 : vector<1x32xf32>
    %cst_72 = arith.constant dense<0.000000e+00> : vector<1xf32>
    %152 = vector.multi_reduction <add>, %151, %cst_72 [1] : vector<1x32xf32> to vector<1xf32>
    %153 = vector.shape_cast %152 : vector<1xf32> to vector<1x1xf32>
    %154 = math.sqrt %153 : vector<1x1xf32>
    %155 = arith.mulf %145, %145 : vector<1x32xf32>
    %cst_73 = arith.constant dense<0.000000e+00> : vector<1xf32>
    %156 = vector.multi_reduction <add>, %155, %cst_73 [1] : vector<1x32xf32> to vector<1xf32>
    %157 = vector.shape_cast %156 : vector<1xf32> to vector<1x1xf32>
    %158 = math.sqrt %157 : vector<1x1xf32>
    %159 = arith.mulf %154, %158 : vector<1x1xf32>
    %cst_74 = arith.constant 9.99999993E-9 : f32
    %160 = vector.broadcast %cst_74 : f32 to vector<1x1xf32>
    %161 = arith.maximumf %159, %160 : vector<1x1xf32>
    %162 = arith.divf %150, %161 : vector<1x1xf32>
    %cst_75 = arith.constant 1.000000e+00 : f32
    %163 = vector.broadcast %cst_75 : f32 to vector<1x1xf32>
    %164 = arith.addf %162, %163 : vector<1x1xf32>
    %cst_76 = arith.constant 5.000000e-01 : f32
    %165 = vector.broadcast %cst_76 : f32 to vector<1x1xf32>
    %166 = arith.mulf %164, %165 : vector<1x1xf32>
    %167 = arith.subf %166, %147 : vector<1x1xf32>
    %168 = arith.mulf %167, %167 : vector<1x1xf32>
    %cst_77 = arith.constant 0.000000e+00 : f32
    %169 = vector.broadcast %cst_77 : f32 to vector<7x1xf32>
    %170 = tpu.concatenate %162, %169 in 0 : vector<1x1xf32>, vector<7x1xf32> -> vector<8x1xf32>
    %171 = tpu.concatenate %168, %169 in 0 : vector<1x1xf32>, vector<7x1xf32> -> vector<8x1xf32>
    %172 = tpu.iota {dimensions = array<i32: 1>} : vector<8x128xi32>
    %c0_i32 = arith.constant 0 : i32
    %173 = vector.broadcast %c0_i32 : i32 to vector<8x128xi32>
    %174 = arith.cmpi eq, %172, %173 : vector<8x128xi32>
    %c1_i32 = arith.constant 1 : i32
    %175 = vector.broadcast %c1_i32 : i32 to vector<8x128xi32>
    %176 = arith.cmpi eq, %172, %175 : vector<8x128xi32>
    %cst_78 = arith.constant 0.000000e+00 : f32
    %177 = vector.shape_cast %171 : vector<8x1xf32> to vector<8x1xf32>
    %178 = vector.broadcast %177 : vector<8x1xf32> to vector<8x128xf32>
    %179 = vector.broadcast %cst_78 : f32 to vector<8x128xf32>
    %180 = arith.select %176, %178, %179 : vector<8x128xi1>, vector<8x128xf32>
    %181 = vector.shape_cast %170 : vector<8x1xf32> to vector<8x1xf32>
    %182 = vector.broadcast %181 : vector<8x1xf32> to vector<8x128xf32>
    %183 = arith.select %174, %182, %180 : vector<8x128xi1>, vector<8x128xf32>
    %c0_79 = arith.constant 0 : index
    %c0_80 = arith.constant 0 : index
    %c0_81 = arith.constant 0 : index
    %184 = vector.load %arg20[%c0_79, %c0_80, %c0_81] : memref<1x8x128xf32, #tpu.memory_space<vmem>>, vector<1x8x128xf32>
    %185 = vector.shape_cast %184 : vector<1x8x128xf32> to vector<8x128xf32>
    %186 = vector.shape_cast %183 : vector<8x128xf32> to vector<1x8x128xf32>
    tpu.vector_store %arg20[%c0_79, %c0_80, %c0_81], %186 {strides = array<i32>} : memref<1x8x128xf32, #tpu.memory_space<vmem>>, vector<1x8x128xf32>,
    return
  }
  func.func @transform_0(%arg0: i32) -> (i32, i32, i32) {
    %c0_i32 = arith.constant 0 : i32
    %c0_i32_0 = arith.constant 0 : i32
    %c0_i32_1 = arith.constant 0 : i32
    return %arg0, %c0_i32, %c0_i32_0 : i32, i32, i32
  }
  func.func @transform_1(%arg0: i32) -> (i32, i32, i32) {
    %c0_i32 = arith.constant 0 : i32
    %c0_i32_0 = arith.constant 0 : i32
    %c0_i32_1 = arith.constant 0 : i32
    return %arg0, %c0_i32, %c0_i32_0 : i32, i32, i32
  }
  func.func @transform_2(%arg0: i32) -> (i32, i32, i32) {
    %c0_i32 = arith.constant 0 : i32
    %c0_i32_0 = arith.constant 0 : i32
    %c0_i32_1 = arith.constant 0 : i32
    return %arg0, %c0_i32, %c0_i32_0 : i32, i32, i32
  }
  func.func @transform_3(%arg0: i32) -> (i32, i32, i32) {
    %c0_i32 = arith.constant 0 : i32
    %c0_i32_0 = arith.constant 0 : i32
    %c0_i32_1 = arith.constant 0 : i32
    return %arg0, %c0_i32, %c0_i32_0 : i32, i32, i32
  }
  func.func @transform_4(%arg0: i32) -> (i32, i32, i32) {
    %c0_i32 = arith.constant 0 : i32
    %c0_i32_0 = arith.constant 0 : i32
    %c0_i32_1 = arith.constant 0 : i32
    return %arg0, %c0_i32, %c0_i32_0 : i32, i32, i32
  }
  func.func @transform_5(%arg0: i32) -> (i32, i32) {
    %c0_i32 = arith.constant 0 : i32
    %c0_i32_0 = arith.constant 0 : i32
    %c0_i32_1 = arith.constant 0 : i32
    return %c0_i32, %c0_i32_0 : i32, i32
  }
  func.func @transform_6(%arg0: i32) -> (i32, i32) {
    %c0_i32 = arith.constant 0 : i32
    %c0_i32_0 = arith.constant 0 : i32
    %c0_i32_1 = arith.constant 0 : i32
    return %c0_i32, %c0_i32_0 : i32, i32
  }
  func.func @transform_7(%arg0: i32) -> (i32, i32) {
    %c0_i32 = arith.constant 0 : i32
    %c0_i32_0 = arith.constant 0 : i32
    %c0_i32_1 = arith.constant 0 : i32
    return %c0_i32, %c0_i32_0 : i32, i32
  }
  func.func @transform_8(%arg0: i32) -> (i32, i32) {
    %c0_i32 = arith.constant 0 : i32
    %c0_i32_0 = arith.constant 0 : i32
    %c0_i32_1 = arith.constant 0 : i32
    return %c0_i32, %c0_i32_0 : i32, i32
  }
  func.func @transform_9(%arg0: i32) -> (i32, i32) {
    %c0_i32 = arith.constant 0 : i32
    %c0_i32_0 = arith.constant 0 : i32
    %c0_i32_1 = arith.constant 0 : i32
    return %c0_i32, %c0_i32_0 : i32, i32
  }
  func.func @transform_10(%arg0: i32) -> (i32, i32) {
    %c0_i32 = arith.constant 0 : i32
    %c0_i32_0 = arith.constant 0 : i32
    %c0_i32_1 = arith.constant 0 : i32
    return %c0_i32, %c0_i32_0 : i32, i32
  }
  func.func @transform_11(%arg0: i32) -> (i32, i32) {
    %c0_i32 = arith.constant 0 : i32
    %c0_i32_0 = arith.constant 0 : i32
    %c0_i32_1 = arith.constant 0 : i32
    return %c0_i32, %c0_i32_0 : i32, i32
  }
  func.func @transform_12(%arg0: i32) -> (i32, i32) {
    %c0_i32 = arith.constant 0 : i32
    %c0_i32_0 = arith.constant 0 : i32
    %c0_i32_1 = arith.constant 0 : i32
    return %c0_i32, %c0_i32_0 : i32, i32
  }
  func.func @transform_13(%arg0: i32) -> (i32, i32) {
    %c0_i32 = arith.constant 0 : i32
    %c0_i32_0 = arith.constant 0 : i32
    %c0_i32_1 = arith.constant 0 : i32
    return %c0_i32, %c0_i32_0 : i32, i32
  }
  func.func @transform_14(%arg0: i32) -> (i32, i32) {
    %c0_i32 = arith.constant 0 : i32
    %c0_i32_0 = arith.constant 0 : i32
    %c0_i32_1 = arith.constant 0 : i32
    return %c0_i32, %c0_i32_0 : i32, i32
  }
  func.func @transform_15(%arg0: i32) -> (i32, i32) {
    %c0_i32 = arith.constant 0 : i32
    %c0_i32_0 = arith.constant 0 : i32
    %c0_i32_1 = arith.constant 0 : i32
    return %c0_i32, %c0_i32_0 : i32, i32
  }
  func.func @transform_16(%arg0: i32) -> (i32, i32) {
    %c0_i32 = arith.constant 0 : i32
    %c0_i32_0 = arith.constant 0 : i32
    %c0_i32_1 = arith.constant 0 : i32
    return %c0_i32, %c0_i32_0 : i32, i32
  }
  func.func @transform_17(%arg0: i32) -> (i32, i32) {
    %c0_i32 = arith.constant 0 : i32
    %c0_i32_0 = arith.constant 0 : i32
    %c0_i32_1 = arith.constant 0 : i32
    return %c0_i32, %c0_i32_0 : i32, i32
  }
  func.func @transform_18(%arg0: i32) -> (i32, i32) {
    %c0_i32 = arith.constant 0 : i32
    %c0_i32_0 = arith.constant 0 : i32
    %c0_i32_1 = arith.constant 0 : i32
    return %c0_i32, %c0_i32_0 : i32, i32
  }
  func.func @transform_19(%arg0: i32) -> (i32, i32, i32) {
    %c0_i32 = arith.constant 0 : i32
    %c0_i32_0 = arith.constant 0 : i32
    %c0_i32_1 = arith.constant 0 : i32
    return %arg0, %c0_i32, %c0_i32_0 : i32, i32, i32
  }
}

</mosaic_0001>

<llo_original>
// kernel: siamese_forward.1
$region0: #{siamese_forward.1}
  #allocation0 [shape = 'u32[]', space=smem, size = 0x4, offset = 0x4, fixed_abs, tag = 'smem constant byte address 0x4 - core index']
  #allocation1 [shape = 'u32[144,128]{1,0:T(1,128)}', space=vmem, size = 0x12000, scoped, tag = 'internal scratch']
  %s0 = inlined_call_operand.vmem [shape: s32[2,1,8], index: 0, kind: input, shape index: {}]
  %s1 = inlined_call_operand.vmem [shape: s32[2,1,8], index: 1, kind: input, shape index: {}]
  %s2 = inlined_call_operand.vmem [shape: s32[2,1,8], index: 2, kind: input, shape index: {}]
  %s3 = inlined_call_operand.vmem [shape: s32[2,1,8], index: 3, kind: input, shape index: {}]
  %s4 = inlined_call_operand.vmem [shape: f32[2,1,1], index: 4, kind: input, shape index: {}]
  %s5 = inlined_call_operand.vmem [shape: f32[64,32], index: 5, kind: input, shape index: {}]
  %s6 = inlined_call_operand.vmem [shape: f32[8,32], index: 6, kind: input, shape index: {}]
  %s7 = inlined_call_operand.vmem [shape: f32[32,32], index: 7, kind: input, shape index: {}]
  %s8 = inlined_call_operand.vmem [shape: f32[32,32], index: 8, kind: input, shape index: {}]
  %s9 = inlined_call_operand.vmem [shape: f32[32,32], index: 9, kind: input, shape index: {}]
  %s10 = inlined_call_operand.vmem [shape: f32[32,32], index: 10, kind: input, shape index: {}]
  %s11 = inlined_call_operand.hbm [shape: f32[1,32], index: 11, kind: input, shape index: {}]
  %s12 = inlined_call_operand.hbm [shape: f32[1,32], index: 12, kind: input, shape index: {}]
  %s13 = inlined_call_operand.vmem [shape: f32[32,64], index: 13, kind: input, shape index: {}]
  %s14 = inlined_call_operand.hbm [shape: f32[1,64], index: 14, kind: input, shape index: {}]
  %s15 = inlined_call_operand.vmem [shape: f32[64,32], index: 15, kind: input, shape index: {}]
  %s16 = inlined_call_operand.hbm [shape: f32[1,32], index: 16, kind: input, shape index: {}]
  %s17 = inlined_call_operand.vmem [shape: f32[1,32], index: 17, kind: input, shape index: {}]
  %s18 = inlined_call_operand.vmem [shape: f32[1,32], index: 18, kind: input, shape index: {}]
  %s19 = inlined_call_operand.vmem [shape: f32[2,8,128], index: 19, kind: output, shape index: {}]
  %s20 = sld [smem:[#allocation0]]
  $region125: #{siamese_forward.1} parent=0
    _
  %s22 = ssub.s32 1, %s20
  %s23 = scalar_select 0, %s22, %s20
  $region1: #{siamese_forward.1} parent=0
    #allocation2 [shape = 'u8[512]{0}', space=vmem, size = 0x400, scoped, tag = 'input window, operand 11, single buffered']
    #allocation3 [shape = 's32[2]{0}', space=sflag, size = 0x8, scoped, tag = 'scoped memory for siamese_forward.1']
    #allocation4 [shape = 'u8[512]{0}', space=vmem, size = 0x400, scoped, tag = 'input window, operand 12, single buffered']
    #allocation5 [shape = 's32[1]{0}', space=sflag, size = 0x4, scoped, tag = 'scoped memory for siamese_forward.1']
    #allocation6 [shape = 'u8[512]{0}', space=vmem, size = 0x400, scoped, tag = 'input window, operand 14, single buffered']
    #allocation7 [shape = 'u8[512]{0}', space=vmem, size = 0x400, scoped, tag = 'input window, operand 16, single buffered']
    #allocation8 [shape = 's32[1]{0}', space=sflag, size = 0x4, scoped, tag = 'scoped memory for siamese_forward.1']
    %24 = vsyncpa [#allocation3], 0
    %25 = vsyncpa [#allocation5], 0
    %26 = vsyncpa [#allocation8], 0
    loop: start=0, step=1, limit=4
    $region2: #{siamese_forward.1} parent=1 // loop_pre_header
      _
    $region3: #{siamese_forward.1} parent=1 // loop_header
      %s28 = sphi 0, %s32
      %p29 = scmp.ge.s32.totalorder %s28, 4
      %s38 = sphi 0, %s40
      %s41 = sphi 0, %s38
      %s42 = sphi 0, %s41
      %s58 = sphi 0, %s42
      %s64 = sphi 0, %s66
      %s67 = sphi 0, %s64
      %s68 = sphi 0, %s67
      %s84 = sphi 0, %s68
      %s90 = sphi 0, %s92
      %s93 = sphi 0, %s90
      %s94 = sphi 0, %s93
      %s110 = sphi 0, %s94
      %s116 = sphi 0, %s118
      %s119 = sphi 0, %s116
      %s120 = sphi 0, %s119
      %s136 = sphi 0, %s120
      %s142 = sphi 0, %s144
      %s145 = sphi 0, %s142
      %s146 = sphi 0, %s145
      %s162 = sphi 0, %s146
      %s166 = sphi 0, %s166
      %s168 = sphi 0, %s166
      %s169 = sphi 0, %s168
      %s183 = sphi 0, %s169
      %s187 = sphi 0, %s187
      %s189 = sphi 0, %s187
      %s190 = sphi 0, %s189
      %s204 = sphi 0, %s190
      %s208 = sphi 0, %s208
      %s210 = sphi 0, %s208
      %s211 = sphi 0, %s210
      %s225 = sphi 0, %s211
      %s229 = sphi 0, %s229
      %s231 = sphi 0, %s229
      %s232 = sphi 0, %s231
      %s246 = sphi 0, %s232
      %s250 = sphi 0, %s250
      %s252 = sphi 0, %s250
      %s253 = sphi 0, %s252
      %s267 = sphi 0, %s253
      %s271 = sphi 0, %s271
      %s273 = sphi 0, %s271
      %s274 = sphi 0, %s273
      %s288 = sphi 0, %s274
      %s292 = sphi 0, %s292
      %s294 = sphi 0, %s292
      %s295 = sphi 0, %s294
      %s309 = sphi 0, %s295
      %s313 = sphi 0, %s313
      %s315 = sphi 0, %s313
      %s316 = sphi 0, %s315
      %s330 = sphi 0, %s316
      %s334 = sphi 0, %s334
      %s336 = sphi 0, %s334
      %s337 = sphi 0, %s336
      %s351 = sphi 0, %s337
      %s355 = sphi 0, %s355
      %s357 = sphi 0, %s355
      %s358 = sphi 0, %s357
      %s372 = sphi 0, %s358
      %s376 = sphi 0, %s376
      %s378 = sphi 0, %s376
      %s379 = sphi 0, %s378
      %s393 = sphi 0, %s379
      %s397 = sphi 0, %s397
      %s399 = sphi 0, %s397
      %s400 = sphi 0, %s399
      %s414 = sphi 0, %s400
      %s418 = sphi 0, %s418
      %s420 = sphi 0, %s418
      %s421 = sphi 0, %s420
      %s435 = sphi 0, %s421
      %s439 = sphi 0, %s439
      %s441 = sphi 0, %s439
      %s442 = sphi 0, %s441
      %s456 = sphi 0, %s442
      %s462 = sphi 0, %s464
      %s465 = sphi 0, %s462
      %s466 = sphi 0, %s465
      %s482 = sphi 0, %s466
    $region4: #{siamese_forward.1} parent=1 // loop_header_branch
      %31 = sbr.rel (%p29) target = $region8
    $region5: #{siamese_forward.1} parent=1 // loop_body
      %s33 = ssub.s32 %s28, 1
      %s34 = ssub.s32 %s28, 2
      %s35 = sadd.s32 %s28, 1
      %s36 = ssub.s32 %s28, %s35
      %p37 = scmp.eq.s32.totalorder %s36, 0
      %s39 = sadd.s32 %s38, 1
      %s40 = scalar_select %p37, %s38, %s39
      %p43 = pneg %p37
      %p44 = scmp.eq.s32.totalorder %s28, 1
      %p45 = por %p43, %p44
      %p46 = scmp.ne.s32.totalorder %s38, %s41
      %p47 = scmp.eq.s32.totalorder %s28, 0
      %p48 = por %p46, %p47
      %p49 = scmp.ne.s32.totalorder %s38, %s41
      %p50 = scmp.eq.s32.totalorder %s33, 1
      %p51 = por %p49, %p50
      %p52 = scmp.ne.s32.totalorder %s41, %s42
      %p53 = scmp.eq.s32.totalorder %s33, 0
      %p54 = por %p52, %p53
      %p55 = scmp.ne.s32.totalorder %s41, %s42
      %p56 = scmp.eq.s32.totalorder %s34, 1
      %p57 = por %p55, %p56
      %p59 = scmp.ne.s32.totalorder %s42, %s58
      %p60 = scmp.eq.s32.totalorder %s34, 0
      %p61 = por %p59, %p60
      %s62 = ssub.s32 %s28, %s35
      %p63 = scmp.eq.s32.totalorder %s62, 0
      %s65 = sadd.s32 %s64, 1
      %s66 = scalar_select %p63, %s64, %s65
      %p69 = pneg %p63
      %p70 = scmp.eq.s32.totalorder %s28, 1
      %p71 = por %p69, %p70
      %p72 = scmp.ne.s32.totalorder %s64, %s67
      %p73 = scmp.eq.s32.totalorder %s28, 0
      %p74 = por %p72, %p73
      %p75 = scmp.ne.s32.totalorder %s64, %s67
      %p76 = scmp.eq.s32.totalorder %s33, 1
      %p77 = por %p75, %p76
      %p78 = scmp.ne.s32.totalorder %s67, %s68
      %p79 = scmp.eq.s32.totalorder %s33, 0
      %p80 = por %p78, %p79
      %p81 = scmp.ne.s32.totalorder %s67, %s68
      %p82 = scmp.eq.s32.totalorder %s34, 1
      %p83 = por %p81, %p82
      %p85 = scmp.ne.s32.totalorder %s68, %s84
      %p86 = scmp.eq.s32.totalorder %s34, 0
      %p87 = por %p85, %p86
      %s88 = ssub.s32 %s28, %s35
      %p89 = scmp.eq.s32.totalorder %s88, 0
      %s91 = sadd.s32 %s90, 1
      %s92 = scalar_select %p89, %s90, %s91
      %p95 = pneg %p89
      %p96 = scmp.eq.s32.totalorder %s28, 1
      %p97 = por %p95, %p96
      %p98 = scmp.ne.s32.totalorder %s90, %s93
      %p99 = scmp.eq.s32.totalorder %s28, 0
      %p100 = por %p98, %p99
      %p101 = scmp.ne.s32.totalorder %s90, %s93
      %p102 = scmp.eq.s32.totalorder %s33, 1
      %p103 = por %p101, %p102
      %p104 = scmp.ne.s32.totalorder %s93, %s94
      %p105 = scmp.eq.s32.totalorder %s33, 0
      %p106 = por %p104, %p105
      %p107 = scmp.ne.s32.totalorder %s93, %s94
      %p108 = scmp.eq.s32.totalorder %s34, 1
      %p109 = por %p107, %p108
      %p111 = scmp.ne.s32.totalorder %s94, %s110
      %p112 = scmp.eq.s32.totalorder %s34, 0
      %p113 = por %p111, %p112
      %s114 = ssub.s32 %s28, %s35
      %p115 = scmp.eq.s32.totalorder %s114, 0
      %s117 = sadd.s32 %s116, 1
      %s118 = scalar_select %p115, %s116, %s117
      %p121 = pneg %p115
      %p122 = scmp.eq.s32.totalorder %s28, 1
      %p123 = por %p121, %p122
      %p124 = scmp.ne.s32.totalorder %s116, %s119
      %p125 = scmp.eq.s32.totalorder %s28, 0
      %p126 = por %p124, %p125
      %p127 = scmp.ne.s32.totalorder %s116, %s119
      %p128 = scmp.eq.s32.totalorder %s33, 1
      %p129 = por %p127, %p128
      %p130 = scmp.ne.s32.totalorder %s119, %s120
      %p131 = scmp.eq.s32.totalorder %s33, 0
      %p132 = por %p130, %p131
      %p133 = scmp.ne.s32.totalorder %s119, %s120
      %p134 = scmp.eq.s32.totalorder %s34, 1
      %p135 = por %p133, %p134
      %p137 = scmp.ne.s32.totalorder %s120, %s136
      %p138 = scmp.eq.s32.totalorder %s34, 0
      %p139 = por %p137, %p138
      %s140 = ssub.s32 %s28, %s35
      %p141 = scmp.eq.s32.totalorder %s140, 0
      %s143 = sadd.s32 %s142, 1
      %s144 = scalar_select %p141, %s142, %s143
      %p147 = pneg %p141
      %p148 = scmp.eq.s32.totalorder %s28, 1
      %p149 = por %p147, %p148
      %p150 = scmp.ne.s32.totalorder %s142, %s145
      %p151 = scmp.eq.s32.totalorder %s28, 0
      %p152 = por %p150, %p151
      %p153 = scmp.ne.s32.totalorder %s142, %s145
      %p154 = scmp.eq.s32.totalorder %s33, 1
      %p155 = por %p153, %p154
      %p156 = scmp.ne.s32.totalorder %s145, %s146
      %p157 = scmp.eq.s32.totalorder %s33, 0
      %p158 = por %p156, %p157
      %p159 = scmp.ne.s32.totalorder %s145, %s146
      %p160 = scmp.eq.s32.totalorder %s34, 1
      %p161 = por %p159, %p160
      %p163 = scmp.ne.s32.totalorder %s146, %s162
      %p164 = scmp.eq.s32.totalorder %s34, 0
      %p165 = por %p163, %p164
      %s167 = sadd.s32 %s166, 1
      %p170 = scmp.eq.s32.totalorder %s28, 1
      %p171 = scmp.ne.s32.totalorder %s166, %s168
      %p172 = scmp.eq.s32.totalorder %s28, 0
      %p173 = por %p171, %p172
      %p174 = scmp.ne.s32.totalorder %s166, %s168
      %p175 = scmp.eq.s32.totalorder %s33, 1
      %p176 = por %p174, %p175
      %p177 = scmp.ne.s32.totalorder %s168, %s169
      %p178 = scmp.eq.s32.totalorder %s33, 0
      %p179 = por %p177, %p178
      %p180 = scmp.ne.s32.totalorder %s168, %s169
      %p181 = scmp.eq.s32.totalorder %s34, 1
      %p182 = por %p180, %p181
      %p184 = scmp.ne.s32.totalorder %s169, %s183
      %p185 = scmp.eq.s32.totalorder %s34, 0
      %p186 = por %p184, %p185
      %s188 = sadd.s32 %s187, 1
      %p191 = scmp.eq.s32.totalorder %s28, 1
      %p192 = scmp.ne.s32.totalorder %s187, %s189
      %p193 = scmp.eq.s32.totalorder %s28, 0
      %p194 = por %p192, %p193
      %p195 = scmp.ne.s32.totalorder %s187, %s189
      %p196 = scmp.eq.s32.totalorder %s33, 1
      %p197 = por %p195, %p196
      %p198 = scmp.ne.s32.totalorder %s189, %s190
      %p199 = scmp.eq.s32.totalorder %s33, 0
      %p200 = por %p198, %p199
      %p201 = scmp.ne.s32.totalorder %s189, %s190
      %p202 = scmp.eq.s32.totalorder %s34, 1
      %p203 = por %p201, %p202
      %p205 = scmp.ne.s32.totalorder %s190, %s204
      %p206 = scmp.eq.s32.totalorder %s34, 0
      %p207 = por %p205, %p206
      %s209 = sadd.s32 %s208, 1
      %p212 = scmp.eq.s32.totalorder %s28, 1
      %p213 = scmp.ne.s32.totalorder %s208, %s210
      %p214 = scmp.eq.s32.totalorder %s28, 0
      %p215 = por %p213, %p214
      %p216 = scmp.ne.s32.totalorder %s208, %s210
      %p217 = scmp.eq.s32.totalorder %s33, 1
      %p218 = por %p216, %p217
      %p219 = scmp.ne.s32.totalorder %s210, %s211
      %p220 = scmp.eq.s32.totalorder %s33, 0
      %p221 = por %p219, %p220
      %p222 = scmp.ne.s32.totalorder %s210, %s211
      %p223 = scmp.eq.s32.totalorder %s34, 1
      %p224 = por %p222, %p223
      %p226 = scmp.ne.s32.totalorder %s211, %s225
      %p227 = scmp.eq.s32.totalorder %s34, 0
      %p228 = por %p226, %p227
      %s230 = sadd.s32 %s229, 1
      %p233 = scmp.eq.s32.totalorder %s28, 1
      %p234 = scmp.ne.s32.totalorder %s229, %s231
      %p235 = scmp.eq.s32.totalorder %s28, 0
      %p236 = por %p234, %p235
      %p237 = scmp.ne.s32.totalorder %s229, %s231
      %p238 = scmp.eq.s32.totalorder %s33, 1
      %p239 = por %p237, %p238
      %p240 = scmp.ne.s32.totalorder %s231, %s232
      %p241 = scmp.eq.s32.totalorder %s33, 0
      %p242 = por %p240, %p241
      %p243 = scmp.ne.s32.totalorder %s231, %s232
      %p244 = scmp.eq.s32.totalorder %s34, 1
      %p245 = por %p243, %p244
      %p247 = scmp.ne.s32.totalorder %s232, %s246
      %p248 = scmp.eq.s32.totalorder %s34, 0
      %p249 = por %p247, %p248
      %s251 = sadd.s32 %s250, 1
      %p254 = scmp.eq.s32.totalorder %s28, 1
      %p255 = scmp.ne.s32.totalorder %s250, %s252
      %p256 = scmp.eq.s32.totalorder %s28, 0
      %p257 = por %p255, %p256
      %p258 = scmp.ne.s32.totalorder %s250, %s252
      %p259 = scmp.eq.s32.totalorder %s33, 1
      %p260 = por %p258, %p259
      %p261 = scmp.ne.s32.totalorder %s252, %s253
      %p262 = scmp.eq.s32.totalorder %s33, 0
      %p263 = por %p261, %p262
      %p264 = scmp.ne.s32.totalorder %s252, %s253
      %p265 = scmp.eq.s32.totalorder %s34, 1
      %p266 = por %p264, %p265
      %p268 = scmp.ne.s32.totalorder %s253, %s267
      %p269 = scmp.eq.s32.totalorder %s34, 0
      %p270 = por %p268, %p269
      %s272 = sadd.s32 %s271, 1
      %p275 = scmp.eq.s32.totalorder %s28, 1
      %p276 = scmp.ne.s32.totalorder %s271, %s273
      %p277 = scmp.eq.s32.totalorder %s28, 0
      %p278 = por %p276, %p277
      %p279 = scmp.ne.s32.totalorder %s271, %s273
      %p280 = scmp.eq.s32.totalorder %s33, 1
      %p281 = por %p279, %p280
      %p282 = scmp.ne.s32.totalorder %s273, %s274
      %p283 = scmp.eq.s32.totalorder %s33, 0
      %p284 = por %p282, %p283
      %p285 = scmp.ne.s32.totalorder %s273, %s274
      %p286 = scmp.eq.s32.totalorder %s34, 1
      %p287 = por %p285, %p286
      %p289 = scmp.ne.s32.totalorder %s274, %s288
      %p290 = scmp.eq.s32.totalorder %s34, 0
      %p291 = por %p289, %p290
      %s293 = sadd.s32 %s292, 1
      %p296 = scmp.eq.s32.totalorder %s28, 1
      %p297 = scmp.ne.s32.totalorder %s292, %s294
      %p298 = scmp.eq.s32.totalorder %s28, 0
      %p299 = por %p297, %p298
      %p300 = scmp.ne.s32.totalorder %s292, %s294
      %p301 = scmp.eq.s32.totalorder %s33, 1
      %p302 = por %p300, %p301
      %p303 = scmp.ne.s32.totalorder %s294, %s295
      %p304 = scmp.eq.s32.totalorder %s33, 0
      %p305 = por %p303, %p304
      %p306 = scmp.ne.s32.totalorder %s294, %s295
      %p307 = scmp.eq.s32.totalorder %s34, 1
      %p308 = por %p306, %p307
      %p310 = scmp.ne.s32.totalorder %s295, %s309
      %p311 = scmp.eq.s32.totalorder %s34, 0
      %p312 = por %p310, %p311
      %s314 = sadd.s32 %s313, 1
      %p317 = scmp.eq.s32.totalorder %s28, 1
      %p318 = scmp.ne.s32.totalorder %s313, %s315
      %p319 = scmp.eq.s32.totalorder %s28, 0
      %p320 = por %p318, %p319
      %p321 = scmp.ne.s32.totalorder %s313, %s315
      %p322 = scmp.eq.s32.totalorder %s33, 1
      %p323 = por %p321, %p322
      %p324 = scmp.ne.s32.totalorder %s315, %s316
      %p325 = scmp.eq.s32.totalorder %s33, 0
      %p326 = por %p324, %p325
      %p327 = scmp.ne.s32.totalorder %s315, %s316
      %p328 = scmp.eq.s32.totalorder %s34, 1
      %p329 = por %p327, %p328
      %p331 = scmp.ne.s32.totalorder %s316, %s330
      %p332 = scmp.eq.s32.totalorder %s34, 0
      %p333 = por %p331, %p332
      %s335 = sadd.s32 %s334, 1
      %p338 = scmp.eq.s32.totalorder %s28, 1
      %p339 = scmp.ne.s32.totalorder %s334, %s336
      %p340 = scmp.eq.s32.totalorder %s28, 0
      %p341 = por %p339, %p340
      %p342 = scmp.ne.s32.totalorder %s334, %s336
      %p343 = scmp.eq.s32.totalorder %s33, 1
      %p344 = por %p342, %p343
      %p345 = scmp.ne.s32.totalorder %s336, %s337
      %p346 = scmp.eq.s32.totalorder %s33, 0
      %p347 = por %p345, %p346
      %p348 = scmp.ne.s32.totalorder %s336, %s337
      %p349 = scmp.eq.s32.totalorder %s34, 1
      %p350 = por %p348, %p349
      %p352 = scmp.ne.s32.totalorder %s337, %s351
      %p353 = scmp.eq.s32.totalorder %s34, 0
      %p354 = por %p352, %p353
      %s356 = sadd.s32 %s355, 1
      %p359 = scmp.eq.s32.totalorder %s28, 1
      %p360 = scmp.ne.s32.totalorder %s355, %s357
      %p361 = scmp.eq.s32.totalorder %s28, 0
      %p362 = por %p360, %p361
      %p363 = scmp.ne.s32.totalorder %s355, %s357
      %p364 = scmp.eq.s32.totalorder %s33, 1
      %p365 = por %p363, %p364
      %p366 = scmp.ne.s32.totalorder %s357, %s358
      %p367 = scmp.eq.s32.totalorder %s33, 0
      %p368 = por %p366, %p367
      %p369 = scmp.ne.s32.totalorder %s357, %s358
      %p370 = scmp.eq.s32.totalorder %s34, 1
      %p371 = por %p369, %p370
      %p373 = scmp.ne.s32.totalorder %s358, %s372
      %p374 = scmp.eq.s32.totalorder %s34, 0
      %p375 = por %p373, %p374
      %s377 = sadd.s32 %s376, 1
      %p380 = scmp.eq.s32.totalorder %s28, 1
      %p381 = scmp.ne.s32.totalorder %s376, %s378
      %p382 = scmp.eq.s32.totalorder %s28, 0
      %p383 = por %p381, %p382
      %p384 = scmp.ne.s32.totalorder %s376, %s378
      %p385 = scmp.eq.s32.totalorder %s33, 1
      %p386 = por %p384, %p385
      %p387 = scmp.ne.s32.totalorder %s378, %s379
      %p388 = scmp.eq.s32.totalorder %s33, 0
      %p389 = por %p387, %p388
      %p390 = scmp.ne.s32.totalorder %s378, %s379
      %p391 = scmp.eq.s32.totalorder %s34, 1
      %p392 = por %p390, %p391
      %p394 = scmp.ne.s32.totalorder %s379, %s393
      %p395 = scmp.eq.s32.totalorder %s34, 0
      %p396 = por %p394, %p395
      %s398 = sadd.s32 %s397, 1
      %p401 = scmp.eq.s32.totalorder %s28, 1
      %p402 = scmp.ne.s32.totalorder %s397, %s399
      %p403 = scmp.eq.s32.totalorder %s28, 0
      %p404 = por %p402, %p403
      %p405 = scmp.ne.s32.totalorder %s397, %s399
      %p406 = scmp.eq.s32.totalorder %s33, 1
      %p407 = por %p405, %p406
      %p408 = scmp.ne.s32.totalorder %s399, %s400
      %p409 = scmp.eq.s32.totalorder %s33, 0
      %p410 = por %p408, %p409
      %p411 = scmp.ne.s32.totalorder %s399, %s400
      %p412 = scmp.eq.s32.totalorder %s34, 1
      %p413 = por %p411, %p412
      %p415 = scmp.ne.s32.totalorder %s400, %s414
      %p416 = scmp.eq.s32.totalorder %s34, 0
      %p417 = por %p415, %p416
      %s419 = sadd.s32 %s418, 1
      %p422 = scmp.eq.s32.totalorder %s28, 1
      %p423 = scmp.ne.s32.totalorder %s418, %s420
      %p424 = scmp.eq.s32.totalorder %s28, 0
      %p425 = por %p423, %p424
      %p426 = scmp.ne.s32.totalorder %s418, %s420
      %p427 = scmp.eq.s32.totalorder %s33, 1
      %p428 = por %p426, %p427
      %p429 = scmp.ne.s32.totalorder %s420, %s421
      %p430 = scmp.eq.s32.totalorder %s33, 0
      %p431 = por %p429, %p430
      %p432 = scmp.ne.s32.totalorder %s420, %s421
      %p433 = scmp.eq.s32.totalorder %s34, 1
      %p434 = por %p432, %p433
      %p436 = scmp.ne.s32.totalorder %s421, %s435
      %p437 = scmp.eq.s32.totalorder %s34, 0
      %p438 = por %p436, %p437
      %s440 = sadd.s32 %s439, 1
      %p443 = scmp.eq.s32.totalorder %s28, 1
      %p444 = scmp.ne.s32.totalorder %s439, %s441
      %p445 = scmp.eq.s32.totalorder %s28, 0
      %p446 = por %p444, %p445
      %p447 = scmp.ne.s32.totalorder %s439, %s441
      %p448 = scmp.eq.s32.totalorder %s33, 1
      %p449 = por %p447, %p448
      %p450 = scmp.ne.s32.totalorder %s441, %s442
      %p451 = scmp.eq.s32.totalorder %s33, 0
      %p452 = por %p450, %p451
      %p453 = scmp.ne.s32.totalorder %s441, %s442
      %p454 = scmp.eq.s32.totalorder %s34, 1
      %p455 = por %p453, %p454
      %p457 = scmp.ne.s32.totalorder %s442, %s456
      %p458 = scmp.eq.s32.totalorder %s34, 0
      %p459 = por %p457, %p458
      %s460 = ssub.s32 %s28, %s35
      %p461 = scmp.eq.s32.totalorder %s460, 0
      %s463 = sadd.s32 %s462, 1
      %s464 = scalar_select %p461, %s462, %s463
      %p467 = pneg %p461
      %p468 = scmp.eq.s32.totalorder %s28, 1
      %p469 = por %p467, %p468
      %p470 = scmp.ne.s32.totalorder %s462, %s465
      %p471 = scmp.eq.s32.totalorder %s28, 0
      %p472 = por %p470, %p471
      %p473 = scmp.ne.s32.totalorder %s462, %s465
      %p474 = scmp.eq.s32.totalorder %s33, 1
      %p475 = por %p473, %p474
      %p476 = scmp.ne.s32.totalorder %s465, %s466
      %p477 = scmp.eq.s32.totalorder %s33, 0
      %p478 = por %p476, %p477
      %p479 = scmp.ne.s32.totalorder %s465, %s466
      %p480 = scmp.eq.s32.totalorder %s34, 1
      %p481 = por %p479, %p480
      %p483 = scmp.ne.s32.totalorder %s466, %s482
      %p484 = scmp.eq.s32.totalorder %s34, 0
      %p485 = por %p483, %p484
      %p486 = scmp.le.s32.totalorder 1, %s28
      %p487 = scmp.lt.s32.totalorder %s28, 3
      %p488 = pnand %p486, %p487
      %p489 = pneg %p488
      // Predicated region
      $region9: #{siamese_forward.1} parent=5 // pred_check
        _
      $region10: #{siamese_forward.1} parent=5 // pred_check_branch
        %491 = sbr.rel (%p488) target = $region12
      $region11: #{siamese_forward.1} parent=5 // pred_region
        %s492 = ssub.s32 %s28, 1
        // Predicated region
        $region13: #{siamese_forward.1} parent=11 // pred_check
          %p493 = pneg %p179
        $region14: #{siamese_forward.1} parent=11 // pred_check_branch
          %495 = sbr.rel (%p493) target = $region16
        $region15: #{siamese_forward.1} parent=11 // pred_region
          _
        $region16: #{siamese_forward.1} parent=11 // pred_fallthru
          _
        // Predicated region
        $region17: #{siamese_forward.1} parent=11 // pred_check
          %p496 = pneg %p200
        $region18: #{siamese_forward.1} parent=11 // pred_check_branch
          %498 = sbr.rel (%p496) target = $region20
        $region19: #{siamese_forward.1} parent=11 // pred_region
          _
        $region20: #{siamese_forward.1} parent=11 // pred_fallthru
          _
        // Predicated region
        $region21: #{siamese_forward.1} parent=11 // pred_check
          %p499 = pneg %p221
        $region22: #{siamese_forward.1} parent=11 // pred_check_branch
          %501 = sbr.rel (%p499) target = $region24
        $region23: #{siamese_forward.1} parent=11 // pred_region
          _
        $region24: #{siamese_forward.1} parent=11 // pred_fallthru
          _
        // Predicated region
        $region25: #{siamese_forward.1} parent=11 // pred_check
          %p502 = pneg %p242
        $region26: #{siamese_forward.1} parent=11 // pred_check_branch
          %504 = sbr.rel (%p502) target = $region28
        $region27: #{siamese_forward.1} parent=11 // pred_region
          _
        $region28: #{siamese_forward.1} parent=11 // pred_fallthru
          _
        // Predicated region
        $region29: #{siamese_forward.1} parent=11 // pred_check
          %p505 = pneg %p263
        $region30: #{siamese_forward.1} parent=11 // pred_check_branch
          %507 = sbr.rel (%p505) target = $region32
        $region31: #{siamese_forward.1} parent=11 // pred_region
          _
        $region32: #{siamese_forward.1} parent=11 // pred_fallthru
          _
        // Predicated region
        $region33: #{siamese_forward.1} parent=11 // pred_check
          %p508 = pneg %p284
        $region34: #{siamese_forward.1} parent=11 // pred_check_branch
          %510 = sbr.rel (%p508) target = $region36
        $region35: #{siamese_forward.1} parent=11 // pred_region
          _
        $region36: #{siamese_forward.1} parent=11 // pred_fallthru
          _
        // Predicated region
        $region37: #{siamese_forward.1} parent=11 // pred_check
          %p511 = pneg %p305
        $region38: #{siamese_forward.1} parent=11 // pred_check_branch
          %513 = sbr.rel (%p511) target = $region40
        $region39: #{siamese_forward.1} parent=11 // pred_region
          %s515 = ssub.s32 16, 16
          %516 = vsyncadd [#allocation3], %s515
          %s518 = sshll.u32 [#allocation2], 4
          %s519 = int_to_ptr.vmem [resolvable:$true] %s518
          %521 = dma.hbm_to_vmem [thread:$0]  %s11, 16, %s519, [#allocation3]
        $region40: #{siamese_forward.1} parent=11 // pred_fallthru
          _
        // Predicated region
        $region41: #{siamese_forward.1} parent=11 // pred_check
          %p522 = pneg %p326
        $region42: #{siamese_forward.1} parent=11 // pred_check_branch
          %524 = sbr.rel (%p522) target = $region44
        $region43: #{siamese_forward.1} parent=11 // pred_region
          %s526 = ssub.s32 16, 16
          %527 = vsyncadd [#allocation5], %s526
          %s529 = sshll.u32 [#allocation4], 4
          %s530 = int_to_ptr.vmem [resolvable:$true] %s529
          %532 = dma.hbm_to_vmem [thread:$0]  %s12, 16, %s530, [#allocation5]
        $region44: #{siamese_forward.1} parent=11 // pred_fallthru
          _
        // Predicated region
        $region45: #{siamese_forward.1} parent=11 // pred_check
          %p533 = pneg %p347
        $region46: #{siamese_forward.1} parent=11 // pred_check_branch
          %535 = sbr.rel (%p533) target = $region48
        $region47: #{siamese_forward.1} parent=11 // pred_region
          _
        $region48: #{siamese_forward.1} parent=11 // pred_fallthru
          _
        // Predicated region
        $region49: #{siamese_forward.1} parent=11 // pred_check
          %p536 = pneg %p368
        $region50: #{siamese_forward.1} parent=11 // pred_check_branch
          %538 = sbr.rel (%p536) target = $region52
        $region51: #{siamese_forward.1} parent=11 // pred_region
          %s540 = ssub.s32 16, 16
          %541 = vsyncadd [#allocation5], %s540
          %s543 = sshll.u32 [#allocation6], 4
          %s544 = int_to_ptr.vmem [resolvable:$true] %s543
          %546 = dma.hbm_to_vmem [thread:$0]  %s14, 16, %s544, [#allocation5]
        $region52: #{siamese_forward.1} parent=11 // pred_fallthru
          _
        // Predicated region
        $region53: #{siamese_forward.1} parent=11 // pred_check
          %p547 = pneg %p389
        $region54: #{siamese_forward.1} parent=11 // pred_check_branch
          %549 = sbr.rel (%p547) target = $region56
        $region55: #{siamese_forward.1} parent=11 // pred_region
          _
        $region56: #{siamese_forward.1} parent=11 // pred_fallthru
          _
        // Predicated region
        $region57: #{siamese_forward.1} parent=11 // pred_check
          %p550 = pneg %p410
        $region58: #{siamese_forward.1} parent=11 // pred_check_branch
          %552 = sbr.rel (%p550) target = $region60
        $region59: #{siamese_forward.1} parent=11 // pred_region
          %s554 = ssub.s32 16, 16
          %555 = vsyncadd [#allocation8], %s554
          %s557 = sshll.u32 [#allocation7], 4
          %s558 = int_to_ptr.vmem [resolvable:$true] %s557
          %560 = dma.hbm_to_vmem [thread:$0]  %s16, 16, %s558, [#allocation8]
        $region60: #{siamese_forward.1} parent=11 // pred_fallthru
          _
        // Predicated region
        $region61: #{siamese_forward.1} parent=11 // pred_check
          %p561 = pneg %p431
        $region62: #{siamese_forward.1} parent=11 // pred_check_branch
          %563 = sbr.rel (%p561) target = $region64
        $region63: #{siamese_forward.1} parent=11 // pred_region
          _
        $region64: #{siamese_forward.1} parent=11 // pred_fallthru
          _
        // Predicated region
        $region65: #{siamese_forward.1} parent=11 // pred_check
          %p564 = pneg %p452
        $region66: #{siamese_forward.1} parent=11 // pred_check_branch
          %566 = sbr.rel (%p564) target = $region68
        $region67: #{siamese_forward.1} parent=11 // pred_region
          _
        $region68: #{siamese_forward.1} parent=11 // pred_fallthru
          _
      $region12: #{siamese_forward.1} parent=5 // pred_fallthru
        _
      %p567 = scmp.lt.s32.totalorder %s28, 2
      // Predicated region
      $region69: #{siamese_forward.1} parent=5 // pred_check
        %p568 = pneg %p567
      $region70: #{siamese_forward.1} parent=5 // pred_check_branch
        %570 = sbr.rel (%p568) target = $region72
      $region71: #{siamese_forward.1} parent=5 // pred_region
        // Predicated region
        $region73: #{siamese_forward.1} parent=71 // pred_check
          %p571 = pneg %p48
        $region74: #{siamese_forward.1} parent=71 // pred_check_branch
          %573 = sbr.rel (%p571) target = $region76
        $region75: #{siamese_forward.1} parent=71 // pred_region
          %p574 = scmp.lt.s32.totalorder %s28, 1
          %s575 = scalar_select %p574, %s28, 1
          %s576 = scalar_lea.vmem %s0, %s575
        $region76: #{siamese_forward.1} parent=71 // pred_fallthru
          _
        // Predicated region
        $region77: #{siamese_forward.1} parent=71 // pred_check
          %p577 = pneg %p74
        $region78: #{siamese_forward.1} parent=71 // pred_check_branch
          %579 = sbr.rel (%p577) target = $region80
        $region79: #{siamese_forward.1} parent=71 // pred_region
          %p580 = scmp.lt.s32.totalorder %s28, 1
          %s581 = scalar_select %p580, %s28, 1
          %s582 = scalar_lea.vmem %s1, %s581
        $region80: #{siamese_forward.1} parent=71 // pred_fallthru
          _
        // Predicated region
        $region81: #{siamese_forward.1} parent=71 // pred_check
          %p583 = pneg %p100
        $region82: #{siamese_forward.1} parent=71 // pred_check_branch
          %585 = sbr.rel (%p583) target = $region84
        $region83: #{siamese_forward.1} parent=71 // pred_region
          %p586 = scmp.lt.s32.totalorder %s28, 1
          %s587 = scalar_select %p586, %s28, 1
          %s588 = scalar_lea.vmem %s2, %s587
        $region84: #{siamese_forward.1} parent=71 // pred_fallthru
          _
        // Predicated region
        $region85: #{siamese_forward.1} parent=71 // pred_check
          %p589 = pneg %p126
        $region86: #{siamese_forward.1} parent=71 // pred_check_branch
          %591 = sbr.rel (%p589) target = $region88
        $region87: #{siamese_forward.1} parent=71 // pred_region
          %p592 = scmp.lt.s32.totalorder %s28, 1
          %s593 = scalar_select %p592, %s28, 1
          %s594 = scalar_lea.vmem %s3, %s593
        $region88: #{siamese_forward.1} parent=71 // pred_fallthru
          _
        // Predicated region
        $region89: #{siamese_forward.1} parent=71 // pred_check
          %p595 = pneg %p152
        $region90: #{siamese_forward.1} parent=71 // pred_check_branch
          %597 = sbr.rel (%p595) target = $region92
        $region91: #{siamese_forward.1} parent=71 // pred_region
          %p598 = scmp.lt.s32.totalorder %s28, 1
          %s599 = scalar_select %p598, %s28, 1
          %s600 = scalar_lea.vmem %s4, %s599
        $region92: #{siamese_forward.1} parent=71 // pred_fallthru
          _
      $region72: #{siamese_forward.1} parent=5 // pred_fallthru
        _
      %p601 = scmp.le.s32.totalorder 1, %s28
      %p602 = scmp.lt.s32.totalorder %s28, 3
      %p603 = pnand %p601, %p602
      %p604 = pneg %p603
      // Predicated region
      $region93: #{siamese_forward.1} parent=5 // pred_check
        _
      $region94: #{siamese_forward.1} parent=5 // pred_check_branch
        %606 = sbr.rel (%p603) target = $region96
      $region95: #{siamese_forward.1} parent=5 // pred_region
        %s607 = ssub.s32 %s28, 1
        // Predicated region
        $region97: #{siamese_forward.1} parent=95 // pred_check
          %p608 = pneg %p305
        $region98: #{siamese_forward.1} parent=95 // pred_check_branch
          %610 = sbr.rel (%p608) target = $region100
        $region99: #{siamese_forward.1} parent=95 // pred_region
          %611 = dma.done [#allocation3], 16
        $region100: #{siamese_forward.1} parent=95 // pred_fallthru
          _
        // Predicated region
        $region101: #{siamese_forward.1} parent=95 // pred_check
          %p612 = pneg %p326
        $region102: #{siamese_forward.1} parent=95 // pred_check_branch
          %614 = sbr.rel (%p612) target = $region104
        $region103: #{siamese_forward.1} parent=95 // pred_region
          %615 = dma.done [#allocation5], 16
        $region104: #{siamese_forward.1} parent=95 // pred_fallthru
          _
        // Predicated region
        $region105: #{siamese_forward.1} parent=95 // pred_check
          %p616 = pneg %p368
        $region106: #{siamese_forward.1} parent=95 // pred_check_branch
          %618 = sbr.rel (%p616) target = $region108
        $region107: #{siamese_forward.1} parent=95 // pred_region
          %619 = dma.done [#allocation5], 16
        $region108: #{siamese_forward.1} parent=95 // pred_fallthru
          _
        // Predicated region
        $region109: #{siamese_forward.1} parent=95 // pred_check
          %p620 = pneg %p410
        $region110: #{siamese_forward.1} parent=95 // pred_check_branch
          %622 = sbr.rel (%p620) target = $region112
        $region111: #{siamese_forward.1} parent=95 // pred_region
          %623 = dma.done [#allocation8], 16
        $region112: #{siamese_forward.1} parent=95 // pred_fallthru
          _
        %p624 = scmp.lt.s32.totalorder %s33, 1
        %s625 = scalar_select %p624, %s33, 1
        %s626 = scalar_lea.vmem %s0, %s625
        %p627 = pneg %p54
        %p628 = pneg %p51
        %p629 = scmp.lt.s32.totalorder %s33, 1
        %s630 = scalar_select %p629, %s33, 1
        %s631 = scalar_lea.vmem %s1, %s630
        %p632 = pneg %p80
        %p633 = pneg %p77
        %p634 = scmp.lt.s32.totalorder %s33, 1
        %s635 = scalar_select %p634, %s33, 1
        %s636 = scalar_lea.vmem %s2, %s635
        %p637 = pneg %p106
        %p638 = pneg %p103
        %p639 = scmp.lt.s32.totalorder %s33, 1
        %s640 = scalar_select %p639, %s33, 1
        %s641 = scalar_lea.vmem %s3, %s640
        %p642 = pneg %p132
        %p643 = pneg %p129
        %p644 = scmp.lt.s32.totalorder %s33, 1
        %s645 = scalar_select %p644, %s33, 1
        %s646 = scalar_lea.vmem %s4, %s645
        %p647 = pneg %p158
        %p648 = pneg %p155
        %p649 = pneg %p179
        %p650 = pneg %p176
        %p651 = pneg %p200
        %p652 = pneg %p197
        %p653 = pneg %p221
        %p654 = pneg %p218
        %p655 = pneg %p242
        %p656 = pneg %p239
        %p657 = pneg %p263
        %p658 = pneg %p260
        %p659 = pneg %p284
        %p660 = pneg %p281
        %p661 = pneg %p305
        %p662 = pneg %p302
        %p663 = pneg %p326
        %p664 = pneg %p323
        %p665 = pneg %p347
        %p666 = pneg %p344
        %p667 = pneg %p368
        %p668 = pneg %p365
        %p669 = pneg %p389
        %p670 = pneg %p386
        %p671 = pneg %p410
        %p672 = pneg %p407
        %p673 = pneg %p431
        %p674 = pneg %p428
        %p675 = pneg %p452
        %p676 = pneg %p449
        %p677 = pneg %p478
        %p678 = pneg %p475
        %p679 = scmp.lt.s32.totalorder %s33, 1
        %s680 = scalar_select %p679, %s33, 1
        %s681 = smul.addr %s680, 8
        %s682 = scalar_lea.vmem %s19, %s681
        %p683 = scmp.lt.s32.totalorder %s33, 1
        %s684 = scalar_select %p683, %s33, 1
        %s685 = scalar_lea.vmem %s0, %s684
        %p686 = scmp.lt.s32.totalorder %s33, 1
        %s687 = scalar_select %p686, %s33, 1
        %s688 = scalar_lea.vmem %s1, %s687
        %p689 = scmp.lt.s32.totalorder %s33, 1
        %s690 = scalar_select %p689, %s33, 1
        %s691 = scalar_lea.vmem %s2, %s690
        %p692 = scmp.lt.s32.totalorder %s33, 1
        %s693 = scalar_select %p692, %s33, 1
        %s694 = scalar_lea.vmem %s3, %s693
        %p695 = scmp.lt.s32.totalorder %s33, 1
        %s696 = scalar_select %p695, %s33, 1
        %s697 = scalar_lea.vmem %s4, %s696
        %p698 = scmp.lt.s32.totalorder %s33, 1
        %s699 = scalar_select %p698, %s33, 1
        %s700 = smul.addr %s699, 8
        %s701 = scalar_lea.vmem %s19, %s700
        %v702 = vld [vmem:[%s685] sm:$0x1]
        %v703 = vld [vmem:[%s688] sm:$0x1]
        %v704 = vlaneseq
        %v705 = vshrl.u32 %v704, 7
        %v706 = vsub.s32 0, %v705
        %v707 = vrot.slane %v703, %v706
        %vm708 = vcmask 1040384
        %v709 = vsel %vm708, %v702, %v707
        %v710 = vlaneseq
        %v711 = vshrl.u32 %v710, 7
        %v712 = vsub.s32 0, %v711
        %v713 = vrot.slane %v709, %v712
        %715 = vbcast.lane.b32.xlu0 %v713, 256
        %v716 = vpop.permute.xlu0 %715
        %v717 = vlaneseq
        %v718 = vshrl.u32 %v717, 7
        %v719 = vsub.s32 1, %v718
        %v720 = vrot.slane %v709, %v719
        %722 = vbcast.lane.b32.xlu0 %v720, 256
        %v723 = vpop.permute.xlu0 %722
        %v724 = vlaneseq
        %v725 = vand.u32 %v724, 127
        %vm726 = vcmp.eq.s32.totalorder %v716, %v725
        %vm727 = vcmp.eq.s32.totalorder %v723, %v725
        %v728 = vsel %vm726, 1, 0
        %v729 = vsel %vm727, 1, 0
        %v730 = vcvt.s32.f32 %v728
        %v731 = vcvt.s32.f32 %v729
        %v732 = vld [vmem:[%s5] sm:$0xff]
        %v733 = vld [vmem:[%s5 + $0x8] sm:$0xff]
        %v734 = vld [vmem:[%s5 + $0x10] sm:$0xff]
        %v735 = vld [vmem:[%s5 + $0x18] sm:$0xff]
        %v736 = vld [vmem:[%s5 + $0x20] sm:$0xff]
        %v737 = vld [vmem:[%s5 + $0x28] sm:$0xff]
        %v738 = vld [vmem:[%s5 + $0x30] sm:$0xff]
        %v739 = vld [vmem:[%s5 + $0x38] sm:$0xff]
        %vm740 = vcmask 523264
        %v742 = vsel %vm740, %v730, 0
        %v745 = vsel %vm740, %v731, 0
        %747 = vmatprep.subr.mxu0 0.0
        %748 = vmatpush1.msra.mxu0 0.0
        %749 = vmatprep.subr.mxu0 0.0
        %750 = vmatpush1.msra.mxu0 0.0
        %751 = vmatprep.subr.mxu0 0.0
        %752 = vmatpush1.msra.mxu0 0.0
        %753 = vmatprep.subr.mxu0 0.0
        %754 = vmatpush1.msra.mxu0 0.0
        %755 = vmatprep.subr.mxu0 0.0
        %756 = vmatpush1.msra.mxu0 0.0
        %757 = vmatprep.subr.mxu0 0.0
        %758 = vmatpush1.msra.mxu0 0.0
        %759 = vmatprep.subr.mxu0 0.0
        %760 = vmatpush1.msra.mxu0 0.0
        %761 = vmatprep.subr.mxu0 0.0
        %762 = vmatpush1.msra.mxu0 0.0
        %763 = vmatprep.subr.mxu0 0.0
        %764 = vmatpush1.msra.mxu0 %v739
        %765 = vmatprep.subr.mxu0 0.0
        %766 = vmatpush1.msra.mxu0 %v738
        %767 = vmatprep.subr.mxu0 0.0
        %768 = vmatpush1.msra.mxu0 %v737
        %769 = vmatprep.subr.mxu0 0.0
        %770 = vmatpush1.msra.mxu0 %v736
        %771 = vmatprep.subr.mxu0 0.0
        %772 = vmatpush1.msra.mxu0 %v735
        %773 = vmatprep.subr.mxu0 0.0
        %774 = vmatpush1.msra.mxu0 %v734
        %775 = vmatprep.subr.mxu0 0.0
        %776 = vmatpush1.msra.mxu0 %v733
        %777 = vmatprep.subr.mxu0 0.0
        %778 = vmatpush1.msra.mxu0 %v732
        %779 = vmatprep.subr.mxu0 0.0
        %780 = vmatpush2.msra.mxu0 0.0
        %781 = vmatprep.subr.mxu0 0.0
        %782 = vmatpush2.msra.mxu0 0.0
        %783 = vmatprep.subr.mxu0 0.0
        %784 = vmatpush2.msra.mxu0 0.0
        %785 = vmatprep.subr.mxu0 0.0
        %786 = vmatpush2.msra.mxu0 0.0
        %787 = vmatprep.subr.mxu0 0.0
        %788 = vmatpush2.msra.mxu0 0.0
        %789 = vmatprep.subr.mxu0 0.0
        %790 = vmatpush2.msra.mxu0 0.0
        %791 = vmatprep.subr.mxu0 0.0
        %792 = vmatpush2.msra.mxu0 0.0
        %793 = vmatprep.subr.mxu0 0.0
        %794 = vmatpush2.msra.mxu0 0.0
        %795 = vmatprep.subr.mxu0 0.0
        %796 = vmatpush2.msra.mxu0 0.0
        %797 = vmatprep.subr.mxu0 0.0
        %798 = vmatpush2.msra.mxu0 0.0
        %799 = vmatprep.subr.mxu0 0.0
        %800 = vmatpush2.msra.mxu0 0.0
        %801 = vmatprep.subr.mxu0 0.0
        %802 = vmatpush2.msra.mxu0 0.0
        %803 = vmatprep.subr.mxu0 0.0
        %804 = vmatpush2.msra.mxu0 0.0
        %805 = vmatprep.subr.mxu0 0.0
        %806 = vmatpush2.msra.mxu0 0.0
        %807 = vmatprep.subr.mxu0 0.0
        %808 = vmatpush2.msra.mxu0 0.0
        %809 = vmatprep.subr.mxu0 0.0
        %810 = vmatpush2.msra.mxu0 0.0
        %811 = vmatprep.mubr.f32.mxu0 0.0
        %812 = vmatmul.mubr.f32.gmra.mxu0 %v742
        %v813 = vpop.f32.mrf.mxu0
        %v814 = vadd.f32 0.0, %v813
        %v815 = vpop.f32.mrf.mxu0
        %816 = vmatprep.mubr.f32.mxu0 0.0
        %817 = vmatmul.mubr.f32.gmra.mxu0 %v745
        %v818 = vpop.f32.mrf.mxu0
        %v819 = vadd.f32 0.0, %v818
        %v820 = vpop.f32.mrf.mxu0
        %821 = vdwg.mxu0
        %v822 = vld [vmem:[%s6] sm:$0xff]
        %v823 = vadd.f32 %v814, %v822
        %v824 = vadd.f32 %v819, %v822
        %v825 = vld [vmem:[%s7] sm:$0xff]
        %v826 = vld [vmem:[%s7 + $0x8] sm:$0xff]
        %v827 = vld [vmem:[%s7 + $0x10] sm:$0xff]
        %v828 = vld [vmem:[%s7 + $0x18] sm:$0xff]
        %v831 = vrot.slane %v824, 7
        %vm832 = vcmask 1041409
        %v833 = vsel %vm832, %v831, %v823
        %vm834 = vcmask 261120
        %v835 = vsel %vm834, %v833, 0
        %837 = vmatprep.subr.mxu0 0.0
        %838 = vmatpush1.msra.mxu0 0.0
        %839 = vmatprep.subr.mxu0 0.0
        %840 = vmatpush1.msra.mxu0 0.0
        %841 = vmatprep.subr.mxu0 0.0
        %842 = vmatpush1.msra.mxu0 0.0
        %843 = vmatprep.subr.mxu0 0.0
        %844 = vmatpush1.msra.mxu0 0.0
        %845 = vmatprep.subr.mxu0 0.0
        %846 = vmatpush1.msra.mxu0 0.0
        %847 = vmatprep.subr.mxu0 0.0
        %848 = vmatpush1.msra.mxu0 0.0
        %849 = vmatprep.subr.mxu0 0.0
        %850 = vmatpush1.msra.mxu0 0.0
        %851 = vmatprep.subr.mxu0 0.0
        %852 = vmatpush1.msra.mxu0 0.0
        %853 = vmatprep.subr.mxu0 0.0
        %854 = vmatpush1.msra.mxu0 0.0
        %855 = vmatprep.subr.mxu0 0.0
        %856 = vmatpush1.msra.mxu0 0.0
        %857 = vmatprep.subr.mxu0 0.0
        %858 = vmatpush1.msra.mxu0 0.0
        %859 = vmatprep.subr.mxu0 0.0
        %860 = vmatpush1.msra.mxu0 0.0
        %861 = vmatprep.subr.mxu0 0.0
        %862 = vmatpush1.msra.mxu0 %v828
        %863 = vmatprep.subr.mxu0 0.0
        %864 = vmatpush1.msra.mxu0 %v827
        %865 = vmatprep.subr.mxu0 0.0
        %866 = vmatpush1.msra.mxu0 %v826
        %867 = vmatprep.subr.mxu0 0.0
        %868 = vmatpush1.msra.mxu0 %v825
        %869 = vmatprep.subr.mxu0 0.0
        %870 = vmatpush2.msra.mxu0 0.0
        %871 = vmatprep.subr.mxu0 0.0
        %872 = vmatpush2.msra.mxu0 0.0
        %873 = vmatprep.subr.mxu0 0.0
        %874 = vmatpush2.msra.mxu0 0.0
        %875 = vmatprep.subr.mxu0 0.0
        %876 = vmatpush2.msra.mxu0 0.0
        %877 = vmatprep.subr.mxu0 0.0
        %878 = vmatpush2.msra.mxu0 0.0
        %879 = vmatprep.subr.mxu0 0.0
        %880 = vmatpush2.msra.mxu0 0.0
        %881 = vmatprep.subr.mxu0 0.0
        %882 = vmatpush2.msra.mxu0 0.0
        %883 = vmatprep.subr.mxu0 0.0
        %884 = vmatpush2.msra.mxu0 0.0
        %885 = vmatprep.subr.mxu0 0.0
        %886 = vmatpush2.msra.mxu0 0.0
        %887 = vmatprep.subr.mxu0 0.0
        %888 = vmatpush2.msra.mxu0 0.0
        %889 = vmatprep.subr.mxu0 0.0
        %890 = vmatpush2.msra.mxu0 0.0
        %891 = vmatprep.subr.mxu0 0.0
        %892 = vmatpush2.msra.mxu0 0.0
        %893 = vmatprep.subr.mxu0 0.0
        %894 = vmatpush2.msra.mxu0 0.0
        %895 = vmatprep.subr.mxu0 0.0
        %896 = vmatpush2.msra.mxu0 0.0
        %897 = vmatprep.subr.mxu0 0.0
        %898 = vmatpush2.msra.mxu0 0.0
        %899 = vmatprep.subr.mxu0 0.0
        %900 = vmatpush2.msra.mxu0 0.0
        %901 = vmatprep.mubr.f32.mxu0 0.0
        %902 = vmatmul.mubr.f32.gmra.mxu0 %v835
        %v903 = vpop.f32.mrf.mxu0
        %v904 = vadd.f32 0.0, %v903
        %v905 = vpop.f32.mrf.mxu0
        %906 = vdwg.mxu0
        %v907 = vld [vmem:[%s8] sm:$0xff]
        %v908 = vld [vmem:[%s8 + $0x8] sm:$0xff]
        %v909 = vld [vmem:[%s8 + $0x10] sm:$0xff]
        %v910 = vld [vmem:[%s8 + $0x18] sm:$0xff]
        %v911 = vsel %vm834, %v823, 0
        %v913 = vsel %vm834, %v824, 0
        %915 = vmatprep.subr.mxu0 0.0
        %916 = vmatpush1.msra.mxu0 0.0
        %917 = vmatprep.subr.mxu0 0.0
        %918 = vmatpush1.msra.mxu0 0.0
        %919 = vmatprep.subr.mxu0 0.0
        %920 = vmatpush1.msra.mxu0 0.0
        %921 = vmatprep.subr.mxu0 0.0
        %922 = vmatpush1.msra.mxu0 0.0
        %923 = vmatprep.subr.mxu0 0.0
        %924 = vmatpush1.msra.mxu0 0.0
        %925 = vmatprep.subr.mxu0 0.0
        %926 = vmatpush1.msra.mxu0 0.0
        %927 = vmatprep.subr.mxu0 0.0
        %928 = vmatpush1.msra.mxu0 0.0
        %929 = vmatprep.subr.mxu0 0.0
        %930 = vmatpush1.msra.mxu0 0.0
        %931 = vmatprep.subr.mxu0 0.0
        %932 = vmatpush1.msra.mxu0 0.0
        %933 = vmatprep.subr.mxu0 0.0
        %934 = vmatpush1.msra.mxu0 0.0
        %935 = vmatprep.subr.mxu0 0.0
        %936 = vmatpush1.msra.mxu0 0.0
        %937 = vmatprep.subr.mxu0 0.0
        %938 = vmatpush1.msra.mxu0 0.0
        %939 = vmatprep.subr.mxu0 0.0
        %940 = vmatpush1.msra.mxu0 %v910
        %941 = vmatprep.subr.mxu0 0.0
        %942 = vmatpush1.msra.mxu0 %v909
        %943 = vmatprep.subr.mxu0 0.0
        %944 = vmatpush1.msra.mxu0 %v908
        %945 = vmatprep.subr.mxu0 0.0
        %946 = vmatpush1.msra.mxu0 %v907
        %947 = vmatprep.subr.mxu0 0.0
        %948 = vmatpush2.msra.mxu0 0.0
        %949 = vmatprep.subr.mxu0 0.0
        %950 = vmatpush2.msra.mxu0 0.0
        %951 = vmatprep.subr.mxu0 0.0
        %952 = vmatpush2.msra.mxu0 0.0
        %953 = vmatprep.subr.mxu0 0.0
        %954 = vmatpush2.msra.mxu0 0.0
        %955 = vmatprep.subr.mxu0 0.0
        %956 = vmatpush2.msra.mxu0 0.0
        %957 = vmatprep.subr.mxu0 0.0
        %958 = vmatpush2.msra.mxu0 0.0
        %959 = vmatprep.subr.mxu0 0.0
        %960 = vmatpush2.msra.mxu0 0.0
        %961 = vmatprep.subr.mxu0 0.0
        %962 = vmatpush2.msra.mxu0 0.0
        %963 = vmatprep.subr.mxu0 0.0
        %964 = vmatpush2.msra.mxu0 0.0
        %965 = vmatprep.subr.mxu0 0.0
        %966 = vmatpush2.msra.mxu0 0.0
        %967 = vmatprep.subr.mxu0 0.0
        %968 = vmatpush2.msra.mxu0 0.0
        %969 = vmatprep.subr.mxu0 0.0
        %970 = vmatpush2.msra.mxu0 0.0
        %971 = vmatprep.subr.mxu0 0.0
        %972 = vmatpush2.msra.mxu0 0.0
        %973 = vmatprep.subr.mxu0 0.0
        %974 = vmatpush2.msra.mxu0 0.0
        %975 = vmatprep.subr.mxu0 0.0
        %976 = vmatpush2.msra.mxu0 0.0
        %977 = vmatprep.subr.mxu0 0.0
        %978 = vmatpush2.msra.mxu0 0.0
        %979 = vmatprep.mubr.f32.mxu0 0.0
        %980 = vmatmul.mubr.f32.gmra.mxu0 %v911
        %v981 = vpop.f32.mrf.mxu0
        %v982 = vadd.f32 0.0, %v981
        %v983 = vpop.f32.mrf.mxu0
        %984 = vmatprep.mubr.f32.mxu0 0.0
        %985 = vmatmul.mubr.f32.gmra.mxu0 %v913
        %v986 = vpop.f32.mrf.mxu0
        %v987 = vadd.f32 0.0, %v986
        %v988 = vpop.f32.mrf.mxu0
        %989 = vdwg.mxu0
        %v990 = vld [vmem:[%s9] sm:$0xff]
        %v991 = vld [vmem:[%s9 + $0x8] sm:$0xff]
        %v992 = vld [vmem:[%s9 + $0x10] sm:$0xff]
        %v993 = vld [vmem:[%s9 + $0x18] sm:$0xff]
        %994 = vmatprep.subr.mxu0 0.0
        %995 = vmatpush1.msra.mxu0 0.0
        %996 = vmatprep.subr.mxu0 0.0
        %997 = vmatpush1.msra.mxu0 0.0
        %998 = vmatprep.subr.mxu0 0.0
        %999 = vmatpush1.msra.mxu0 0.0
        %1000 = vmatprep.subr.mxu0 0.0
        %1001 = vmatpush1.msra.mxu0 0.0
        %1002 = vmatprep.subr.mxu0 0.0
        %1003 = vmatpush1.msra.mxu0 0.0
        %1004 = vmatprep.subr.mxu0 0.0
        %1005 = vmatpush1.msra.mxu0 0.0
        %1006 = vmatprep.subr.mxu0 0.0
        %1007 = vmatpush1.msra.mxu0 0.0
        %1008 = vmatprep.subr.mxu0 0.0
        %1009 = vmatpush1.msra.mxu0 0.0
        %1010 = vmatprep.subr.mxu0 0.0
        %1011 = vmatpush1.msra.mxu0 0.0
        %1012 = vmatprep.subr.mxu0 0.0
        %1013 = vmatpush1.msra.mxu0 0.0
        %1014 = vmatprep.subr.mxu0 0.0
        %1015 = vmatpush1.msra.mxu0 0.0
        %1016 = vmatprep.subr.mxu0 0.0
        %1017 = vmatpush1.msra.mxu0 0.0
        %1018 = vmatprep.subr.mxu0 0.0
        %1019 = vmatpush1.msra.mxu0 %v993
        %1020 = vmatprep.subr.mxu0 0.0
        %1021 = vmatpush1.msra.mxu0 %v992
        %1022 = vmatprep.subr.mxu0 0.0
        %1023 = vmatpush1.msra.mxu0 %v991
        %1024 = vmatprep.subr.mxu0 0.0
        %1025 = vmatpush1.msra.mxu0 %v990
        %1026 = vmatprep.subr.mxu0 0.0
        %1027 = vmatpush2.msra.mxu0 0.0
        %1028 = vmatprep.subr.mxu0 0.0
        %1029 = vmatpush2.msra.mxu0 0.0
        %1030 = vmatprep.subr.mxu0 0.0
        %1031 = vmatpush2.msra.mxu0 0.0
        %1032 = vmatprep.subr.mxu0 0.0
        %1033 = vmatpush2.msra.mxu0 0.0
        %1034 = vmatprep.subr.mxu0 0.0
        %1035 = vmatpush2.msra.mxu0 0.0
        %1036 = vmatprep.subr.mxu0 0.0
        %1037 = vmatpush2.msra.mxu0 0.0
        %1038 = vmatprep.subr.mxu0 0.0
        %1039 = vmatpush2.msra.mxu0 0.0
        %1040 = vmatprep.subr.mxu0 0.0
        %1041 = vmatpush2.msra.mxu0 0.0
        %1042 = vmatprep.subr.mxu0 0.0
        %1043 = vmatpush2.msra.mxu0 0.0
        %1044 = vmatprep.subr.mxu0 0.0
        %1045 = vmatpush2.msra.mxu0 0.0
        %1046 = vmatprep.subr.mxu0 0.0
        %1047 = vmatpush2.msra.mxu0 0.0
        %1048 = vmatprep.subr.mxu0 0.0
        %1049 = vmatpush2.msra.mxu0 0.0
        %1050 = vmatprep.subr.mxu0 0.0
        %1051 = vmatpush2.msra.mxu0 0.0
        %1052 = vmatprep.subr.mxu0 0.0
        %1053 = vmatpush2.msra.mxu0 0.0
        %1054 = vmatprep.subr.mxu0 0.0
        %1055 = vmatpush2.msra.mxu0 0.0
        %1056 = vmatprep.subr.mxu0 0.0
        %1057 = vmatpush2.msra.mxu0 0.0
        %1058 = vmatprep.mubr.f32.mxu0 0.0
        %1059 = vmatmul.mubr.f32.gmra.mxu0 %v911
        %v1060 = vpop.f32.mrf.mxu0
        %v1061 = vadd.f32 0.0, %v1060
        %v1062 = vpop.f32.mrf.mxu0
        %1063 = vmatprep.mubr.f32.mxu0 0.0
        %1064 = vmatmul.mubr.f32.gmra.mxu0 %v913
        %v1065 = vpop.f32.mrf.mxu0
        %v1066 = vadd.f32 0.0, %v1065
        %v1067 = vpop.f32.mrf.mxu0
        %1068 = vdwg.mxu0
        %v1070 = vsel %vm834, %v904, 0
        %v1073 = vsel %vm834, %v982, 0
        %v1076 = vsel %vm834, %v987, 0
        %1078 = vmatprep.subr.mxu0 0.0
        %1079 = vmatpush1.xpose.msra.mxu0 0.0
        %1080 = vmatprep.subr.mxu0 0.0
        %1081 = vmatpush1.xpose.msra.mxu0 0.0
        %1082 = vmatprep.subr.mxu0 0.0
        %1083 = vmatpush1.xpose.msra.mxu0 0.0
        %1084 = vmatprep.subr.mxu0 0.0
        %1085 = vmatpush1.xpose.msra.mxu0 0.0
        %1086 = vmatprep.subr.mxu0 0.0
        %1087 = vmatpush1.xpose.msra.mxu0 0.0
        %1088 = vmatprep.subr.mxu0 0.0
        %1089 = vmatpush1.xpose.msra.mxu0 0.0
        %1090 = vmatprep.subr.mxu0 0.0
        %1091 = vmatpush1.xpose.msra.mxu0 0.0
        %1092 = vmatprep.subr.mxu0 0.0
        %1093 = vmatpush1.xpose.msra.mxu0 0.0
        %1094 = vmatprep.subr.mxu0 0.0
        %1095 = vmatpush1.xpose.msra.mxu0 0.0
        %1096 = vmatprep.subr.mxu0 0.0
        %1097 = vmatpush1.xpose.msra.mxu0 0.0
        %1098 = vmatprep.subr.mxu0 0.0
        %1099 = vmatpush1.xpose.msra.mxu0 0.0
        %1100 = vmatprep.subr.mxu0 0.0
        %1101 = vmatpush1.xpose.msra.mxu0 0.0
        %1102 = vmatprep.subr.mxu0 0.0
        %1103 = vmatpush1.xpose.msra.mxu0 0.0
        %1104 = vmatprep.subr.mxu0 0.0
        %1105 = vmatpush1.xpose.msra.mxu0 0.0
        %1106 = vmatprep.subr.mxu0 0.0
        %1107 = vmatpush1.xpose.msra.mxu0 %v1076
        %1108 = vmatprep.subr.mxu0 0.0
        %1109 = vmatpush1.xpose.msra.mxu0 %v1073
        %1110 = vmatprep.subr.mxu0 0.0
        %1111 = vmatpush2.xpose.msra.mxu0 0.0
        %1112 = vmatprep.subr.mxu0 0.0
        %1113 = vmatpush2.xpose.msra.mxu0 0.0
        %1114 = vmatprep.subr.mxu0 0.0
        %1115 = vmatpush2.xpose.msra.mxu0 0.0
        %1116 = vmatprep.subr.mxu0 0.0
        %1117 = vmatpush2.xpose.msra.mxu0 0.0
        %1118 = vmatprep.subr.mxu0 0.0
        %1119 = vmatpush2.xpose.msra.mxu0 0.0
        %1120 = vmatprep.subr.mxu0 0.0
        %1121 = vmatpush2.xpose.msra.mxu0 0.0
        %1122 = vmatprep.subr.mxu0 0.0
        %1123 = vmatpush2.xpose.msra.mxu0 0.0
        %1124 = vmatprep.subr.mxu0 0.0
        %1125 = vmatpush2.xpose.msra.mxu0 0.0
        %1126 = vmatprep.subr.mxu0 0.0
        %1127 = vmatpush2.xpose.msra.mxu0 0.0
        %1128 = vmatprep.subr.mxu0 0.0
        %1129 = vmatpush2.xpose.msra.mxu0 0.0
        %1130 = vmatprep.subr.mxu0 0.0
        %1131 = vmatpush2.xpose.msra.mxu0 0.0
        %1132 = vmatprep.subr.mxu0 0.0
        %1133 = vmatpush2.xpose.msra.mxu0 0.0
        %1134 = vmatprep.subr.mxu0 0.0
        %1135 = vmatpush2.xpose.msra.mxu0 0.0
        %1136 = vmatprep.subr.mxu0 0.0
        %1137 = vmatpush2.xpose.msra.mxu0 0.0
        %1138 = vmatprep.subr.mxu0 0.0
        %1139 = vmatpush2.xpose.msra.mxu0 0.0
        %1140 = vmatprep.subr.mxu0 0.0
        %1141 = vmatpush2.xpose.msra.mxu0 0.0
        %1142 = vmatprep.mubr.f32.mxu0 0.0
        %1143 = vmatmul.mubr.f32.gmra.mxu0 %v1070
        %v1144 = vpop.f32.mrf.mxu0
        %v1145 = vadd.f32 0.0, %v1144
        %v1146 = vpop.f32.mrf.mxu0
        %1147 = vdwg.mxu0
        %v1148 = vmul.f32 %v1145, 0.17677669
        %v1149 = vlaneseq
        %v1150 = vshrl.u32 %v1149, 7
        %v1151 = vmul.u32 %v1150, 8
        %vm1152 = vcmp.ge.s32.totalorder %v725, %v1151
        %v1153 = vadd.s32 %v1151, 8
        %vm1154 = vcmp.lt.s32.totalorder %v725, %v1153
        %vm1155 = vmand %vm1152, %vm1154
        %v1156 = vsel %vm1155, 1, 0
        %v1157 = vcvt.s32.f32 %v1156
        %v1158 = vld [vmem:[%s691] sm:$0x1]
        %v1159 = vld [vmem:[%s694] sm:$0x1]
        %v1160 = vlaneseq
        %v1161 = vshrl.u32 %v1160, 7
        %v1162 = vsub.s32 0, %v1161
        %v1163 = vrot.slane %v1159, %v1162
        %v1164 = vsel %vm708, %v1158, %v1163
        %v1165 = vcvt.s32.f32 %v1164
        %1167 = vrot.lane.b32.xlu0 %v1165, 8
        %v1168 = vpop.permute.xlu0 %1167
        %vm1170 = vcmask 64512
        %v1171 = vsel %vm1170, %v1165, %v1168
        %v1172 = vmul.f32 %v1157, %v1171
        %v1173 = vsub.f32 %v1172, 1.0
        %v1174 = vmul.f32 %v1173, 1e+09
        %v1175 = vadd.f32 %v1148, %v1174
        %vm1176 = vcmask 123904
        %v1177 = vsel %vm1176, %v1175, -inf
        %1178 = vmax.xlane.f32.xlu0 %v1177
        %v1179 = vpop.xlane.xlu0 %1178
        %v1180 = vsub.f32 %v1175, %v1179
        %v1181 = vmul.f32 %v1180, 1.442695
        %v1182 = vpow.pop %v1181
        %v1183 = vsel %vm1176, %v1182, 0.0
        %1184 = vadd.xlane.f32.xlu0 %v1183
        %v1185 = vpop.xlane.xlu0 %1184
        %v1186 = vrcp.pop %v1185
        %v1187 = vmul.f32 %v1182, %v1186
        %vm1188 = vcmask 130048
        %v1190 = vsel %vm1188, %v1187, 0
        %1192 = vmatprep.subr.mxu0 0.0
        %1193 = vmatpush1.msra.mxu0 0.0
        %1194 = vmatprep.subr.mxu0 0.0
        %1195 = vmatpush1.msra.mxu0 0.0
        %1196 = vmatprep.subr.mxu0 0.0
        %1197 = vmatpush1.msra.mxu0 0.0
        %1198 = vmatprep.subr.mxu0 0.0
        %1199 = vmatpush1.msra.mxu0 0.0
        %1200 = vmatprep.subr.mxu0 0.0
        %1201 = vmatpush1.msra.mxu0 0.0
        %1202 = vmatprep.subr.mxu0 0.0
        %1203 = vmatpush1.msra.mxu0 0.0
        %1204 = vmatprep.subr.mxu0 0.0
        %1205 = vmatpush1.msra.mxu0 0.0
        %1206 = vmatprep.subr.mxu0 0.0
        %1207 = vmatpush1.msra.mxu0 0.0
        %1208 = vmatprep.subr.mxu0 0.0
        %1209 = vmatpush1.msra.mxu0 0.0
        %1210 = vmatprep.subr.mxu0 0.0
        %1211 = vmatpush1.msra.mxu0 0.0
        %1212 = vmatprep.subr.mxu0 0.0
        %1213 = vmatpush1.msra.mxu0 0.0
        %1214 = vmatprep.subr.mxu0 0.0
        %1215 = vmatpush1.msra.mxu0 0.0
        %1216 = vmatprep.subr.mxu0 0.0
        %1217 = vmatpush1.msra.mxu0 0.0
        %1218 = vmatprep.subr.mxu0 0.0
        %1219 = vmatpush1.msra.mxu0 0.0
        %1220 = vmatprep.subr.mxu0 0.0
        %1221 = vmatpush1.msra.mxu0 %v1066
        %1222 = vmatprep.subr.mxu0 0.0
        %1223 = vmatpush1.msra.mxu0 %v1061
        %1224 = vmatprep.subr.mxu0 0.0
        %1225 = vmatpush2.msra.mxu0 0.0
        %1226 = vmatprep.subr.mxu0 0.0
        %1227 = vmatpush2.msra.mxu0 0.0
        %1228 = vmatprep.subr.mxu0 0.0
        %1229 = vmatpush2.msra.mxu0 0.0
        %1230 = vmatprep.subr.mxu0 0.0
        %1231 = vmatpush2.msra.mxu0 0.0
        %1232 = vmatprep.subr.mxu0 0.0
        %1233 = vmatpush2.msra.mxu0 0.0
        %1234 = vmatprep.subr.mxu0 0.0
        %1235 = vmatpush2.msra.mxu0 0.0
        %1236 = vmatprep.subr.mxu0 0.0
        %1237 = vmatpush2.msra.mxu0 0.0
        %1238 = vmatprep.subr.mxu0 0.0
        %1239 = vmatpush2.msra.mxu0 0.0
        %1240 = vmatprep.subr.mxu0 0.0
        %1241 = vmatpush2.msra.mxu0 0.0
        %1242 = vmatprep.subr.mxu0 0.0
        %1243 = vmatpush2.msra.mxu0 0.0
        %1244 = vmatprep.subr.mxu0 0.0
        %1245 = vmatpush2.msra.mxu0 0.0
        %1246 = vmatprep.subr.mxu0 0.0
        %1247 = vmatpush2.msra.mxu0 0.0
        %1248 = vmatprep.subr.mxu0 0.0
        %1249 = vmatpush2.msra.mxu0 0.0
        %1250 = vmatprep.subr.mxu0 0.0
        %1251 = vmatpush2.msra.mxu0 0.0
        %1252 = vmatprep.subr.mxu0 0.0
        %1253 = vmatpush2.msra.mxu0 0.0
        %1254 = vmatprep.subr.mxu0 0.0
        %1255 = vmatpush2.msra.mxu0 0.0
        %1256 = vmatprep.mubr.f32.mxu0 0.0
        %1257 = vmatmul.mubr.f32.gmra.mxu0 %v1190
        %v1258 = vpop.f32.mrf.mxu0
        %v1259 = vadd.f32 0.0, %v1258
        %v1260 = vpop.f32.mrf.mxu0
        %1261 = vdwg.mxu0
        %v1262 = vld [vmem:[%s10] sm:$0xff]
        %v1263 = vld [vmem:[%s10 + $0x8] sm:$0xff]
        %v1264 = vld [vmem:[%s10 + $0x10] sm:$0xff]
        %v1265 = vld [vmem:[%s10 + $0x18] sm:$0xff]
        %v1267 = vsel %vm834, %v1259, 0
        %1269 = vmatprep.subr.mxu0 0.0
        %1270 = vmatpush1.msra.mxu0 0.0
        %1271 = vmatprep.subr.mxu0 0.0
        %1272 = vmatpush1.msra.mxu0 0.0
        %1273 = vmatprep.subr.mxu0 0.0
        %1274 = vmatpush1.msra.mxu0 0.0
        %1275 = vmatprep.subr.mxu0 0.0
        %1276 = vmatpush1.msra.mxu0 0.0
        %1277 = vmatprep.subr.mxu0 0.0
        %1278 = vmatpush1.msra.mxu0 0.0
        %1279 = vmatprep.subr.mxu0 0.0
        %1280 = vmatpush1.msra.mxu0 0.0
        %1281 = vmatprep.subr.mxu0 0.0
        %1282 = vmatpush1.msra.mxu0 0.0
        %1283 = vmatprep.subr.mxu0 0.0
        %1284 = vmatpush1.msra.mxu0 0.0
        %1285 = vmatprep.subr.mxu0 0.0
        %1286 = vmatpush1.msra.mxu0 0.0
        %1287 = vmatprep.subr.mxu0 0.0
        %1288 = vmatpush1.msra.mxu0 0.0
        %1289 = vmatprep.subr.mxu0 0.0
        %1290 = vmatpush1.msra.mxu0 0.0
        %1291 = vmatprep.subr.mxu0 0.0
        %1292 = vmatpush1.msra.mxu0 0.0
        %1293 = vmatprep.subr.mxu0 0.0
        %1294 = vmatpush1.msra.mxu0 %v1265
        %1295 = vmatprep.subr.mxu0 0.0
        %1296 = vmatpush1.msra.mxu0 %v1264
        %1297 = vmatprep.subr.mxu0 0.0
        %1298 = vmatpush1.msra.mxu0 %v1263
        %1299 = vmatprep.subr.mxu0 0.0
        %1300 = vmatpush1.msra.mxu0 %v1262
        %1301 = vmatprep.subr.mxu0 0.0
        %1302 = vmatpush2.msra.mxu0 0.0
        %1303 = vmatprep.subr.mxu0 0.0
        %1304 = vmatpush2.msra.mxu0 0.0
        %1305 = vmatprep.subr.mxu0 0.0
        %1306 = vmatpush2.msra.mxu0 0.0
        %1307 = vmatprep.subr.mxu0 0.0
        %1308 = vmatpush2.msra.mxu0 0.0
        %1309 = vmatprep.subr.mxu0 0.0
        %1310 = vmatpush2.msra.mxu0 0.0
        %1311 = vmatprep.subr.mxu0 0.0
        %1312 = vmatpush2.msra.mxu0 0.0
        %1313 = vmatprep.subr.mxu0 0.0
        %1314 = vmatpush2.msra.mxu0 0.0
        %1315 = vmatprep.subr.mxu0 0.0
        %1316 = vmatpush2.msra.mxu0 0.0
        %1317 = vmatprep.subr.mxu0 0.0
        %1318 = vmatpush2.msra.mxu0 0.0
        %1319 = vmatprep.subr.mxu0 0.0
        %1320 = vmatpush2.msra.mxu0 0.0
        %1321 = vmatprep.subr.mxu0 0.0
        %1322 = vmatpush2.msra.mxu0 0.0
        %1323 = vmatprep.subr.mxu0 0.0
        %1324 = vmatpush2.msra.mxu0 0.0
        %1325 = vmatprep.subr.mxu0 0.0
        %1326 = vmatpush2.msra.mxu0 0.0
        %1327 = vmatprep.subr.mxu0 0.0
        %1328 = vmatpush2.msra.mxu0 0.0
        %1329 = vmatprep.subr.mxu0 0.0
        %1330 = vmatpush2.msra.mxu0 0.0
        %1331 = vmatprep.subr.mxu0 0.0
        %1332 = vmatpush2.msra.mxu0 0.0
        %1333 = vmatprep.mubr.f32.mxu0 0.0
        %1334 = vmatmul.mubr.f32.gmra.mxu0 %v1267
        %v1335 = vpop.f32.mrf.mxu0
        %v1336 = vadd.f32 0.0, %v1335
        %v1337 = vpop.f32.mrf.mxu0
        %1338 = vdwg.mxu0
        %v1340 = vrot.slane %v1336, 1
        %v1343 = vadd.f32 %v823, %v1336
        %v1344 = vadd.f32 %v824, %v1340
        %v1347 = vrot.slane %v1344, 7
        %v1348 = vsel %vm832, %v1347, %v1343
        %vm1350 = vcmask 254976
        %v1351 = vsel %vm1350, %v1348, 0.0
        %1352 = vadd.xlane.f32.xlu0 %v1351
        %v1353 = vpop.xlane.xlu0 %1352
        %v1354 = vrcp.pop 32.0
        %v1355 = vmul.f32 %v1353, %v1354
        %v1357 = vrot.slane %v1355, 1
        %v1360 = vsub.f32 %v1343, %v1355
        %v1361 = vsub.f32 %v1344, %v1357
        %v1362 = vmul.f32 %v1360, %v1360
        %v1363 = vmul.f32 %v1361, %v1361
        %v1366 = vrot.slane %v1363, 7
        %v1367 = vsel %vm832, %v1366, %v1362
        %v1369 = vsel %vm1350, %v1367, 0.0
        %1370 = vadd.xlane.f32.xlu0 %v1369
        %v1371 = vpop.xlane.xlu0 %1370
        %v1372 = vmul.f32 %v1371, %v1354
        %v1373 = vadd.f32 %v1372, 1e-05
        %v1374 = vrsqrt.pop %v1373
        %v1376 = vrot.slane %v1374, 1
        %v1379 = vmul.f32 %v1360, %v1374
        %v1380 = vmul.f32 %v1361, %v1376
        %v1381 = vld [vmem:[#allocation2] sm:$0x1]
        %v1383 = vlaneseq
        %v1384 = vshrl.u32 %v1383, 7
        %v1385 = vsub.s32 0, %v1384
        %v1386 = vrot.slane %v1381, %v1385
        %v1388 = vmul.f32 %v1379, %v1386
        %v1389 = vmul.f32 %v1380, %v1386
        %v1390 = vld [vmem:[#allocation4] sm:$0x1]
        %v1392 = vlaneseq
        %v1393 = vshrl.u32 %v1392, 7
        %v1394 = vsub.s32 0, %v1393
        %v1395 = vrot.slane %v1390, %v1394
        %v1397 = vadd.f32 %v1388, %v1395
        %v1398 = vadd.f32 %v1389, %v1395
        %v1399 = vld [vmem:[%s13] sm:$0xff]
        %v1400 = vld [vmem:[%s13 + $0x8] sm:$0xff]
        %v1401 = vld [vmem:[%s13 + $0x10] sm:$0xff]
        %v1402 = vld [vmem:[%s13 + $0x18] sm:$0xff]
        %v1403 = vld [vmem:[#allocation6] sm:$0x1]
        %v1405 = vlaneseq
        %v1406 = vshrl.u32 %v1405, 7
        %v1407 = vsub.s32 0, %v1406
        %v1408 = vrot.slane %v1403, %v1407
        %v1412 = vrot.slane %v1398, 7
        %v1413 = vsel %vm832, %v1412, %v1397
        %v1414 = vsel %vm834, %v1413, 0
        %1416 = vmatprep.subr.mxu0 0.0
        %1417 = vmatpush1.msra.mxu0 0.0
        %1418 = vmatprep.subr.mxu0 0.0
        %1419 = vmatpush1.msra.mxu0 0.0
        %1420 = vmatprep.subr.mxu0 0.0
        %1421 = vmatpush1.msra.mxu0 0.0
        %1422 = vmatprep.subr.mxu0 0.0
        %1423 = vmatpush1.msra.mxu0 0.0
        %1424 = vmatprep.subr.mxu0 0.0
        %1425 = vmatpush1.msra.mxu0 0.0
        %1426 = vmatprep.subr.mxu0 0.0
        %1427 = vmatpush1.msra.mxu0 0.0
        %1428 = vmatprep.subr.mxu0 0.0
        %1429 = vmatpush1.msra.mxu0 0.0
        %1430 = vmatprep.subr.mxu0 0.0
        %1431 = vmatpush1.msra.mxu0 0.0
        %1432 = vmatprep.subr.mxu0 0.0
        %1433 = vmatpush1.msra.mxu0 0.0
        %1434 = vmatprep.subr.mxu0 0.0
        %1435 = vmatpush1.msra.mxu0 0.0
        %1436 = vmatprep.subr.mxu0 0.0
        %1437 = vmatpush1.msra.mxu0 0.0
        %1438 = vmatprep.subr.mxu0 0.0
        %1439 = vmatpush1.msra.mxu0 0.0
        %1440 = vmatprep.subr.mxu0 0.0
        %1441 = vmatpush1.msra.mxu0 %v1402
        %1442 = vmatprep.subr.mxu0 0.0
        %1443 = vmatpush1.msra.mxu0 %v1401
        %1444 = vmatprep.subr.mxu0 0.0
        %1445 = vmatpush1.msra.mxu0 %v1400
        %1446 = vmatprep.subr.mxu0 0.0
        %1447 = vmatpush1.msra.mxu0 %v1399
        %1448 = vmatprep.subr.mxu0 0.0
        %1449 = vmatpush2.msra.mxu0 0.0
        %1450 = vmatprep.subr.mxu0 0.0
        %1451 = vmatpush2.msra.mxu0 0.0
        %1452 = vmatprep.subr.mxu0 0.0
        %1453 = vmatpush2.msra.mxu0 0.0
        %1454 = vmatprep.subr.mxu0 0.0
        %1455 = vmatpush2.msra.mxu0 0.0
        %1456 = vmatprep.subr.mxu0 0.0
        %1457 = vmatpush2.msra.mxu0 0.0
        %1458 = vmatprep.subr.mxu0 0.0
        %1459 = vmatpush2.msra.mxu0 0.0
        %1460 = vmatprep.subr.mxu0 0.0
        %1461 = vmatpush2.msra.mxu0 0.0
        %1462 = vmatprep.subr.mxu0 0.0
        %1463 = vmatpush2.msra.mxu0 0.0
        %1464 = vmatprep.subr.mxu0 0.0
        %1465 = vmatpush2.msra.mxu0 0.0
        %1466 = vmatprep.subr.mxu0 0.0
        %1467 = vmatpush2.msra.mxu0 0.0
        %1468 = vmatprep.subr.mxu0 0.0
        %1469 = vmatpush2.msra.mxu0 0.0
        %1470 = vmatprep.subr.mxu0 0.0
        %1471 = vmatpush2.msra.mxu0 0.0
        %1472 = vmatprep.subr.mxu0 0.0
        %1473 = vmatpush2.msra.mxu0 0.0
        %1474 = vmatprep.subr.mxu0 0.0
        %1475 = vmatpush2.msra.mxu0 0.0
        %1476 = vmatprep.subr.mxu0 0.0
        %1477 = vmatpush2.msra.mxu0 0.0
        %1478 = vmatprep.subr.mxu0 0.0
        %1479 = vmatpush2.msra.mxu0 0.0
        %1480 = vmatprep.mubr.f32.mxu0 0.0
        %1481 = vmatmul.mubr.f32.gmra.mxu0 %v1414
        %v1482 = vpop.f32.mrf.mxu0
        %v1483 = vadd.f32 %v1408, %v1482
        %v1484 = vpop.f32.mrf.mxu0
        %1485 = vdwg.mxu0
        %v1486 = vmul.f32 %v1483, %v1483
        %v1487 = vmul.f32 %v1483, %v1486
        %v1488 = vmul.f32 %v1487, 0.044715
        %v1489 = vadd.f32 %v1483, %v1488
        %v1490 = vmul.f32 %v1489, 0.7978846
        %v1491 = vtanh.pop %v1490
        %v1492 = vadd.f32 %v1491, 1.0
        %v1493 = vmul.f32 %v1492, 0.5
        %v1494 = vmul.f32 %v1483, %v1493
        %v1495 = vld [vmem:[%s15] sm:$0xff]
        %v1496 = vld [vmem:[%s15 + $0x8] sm:$0xff]
        %v1497 = vld [vmem:[%s15 + $0x10] sm:$0xff]
        %v1498 = vld [vmem:[%s15 + $0x18] sm:$0xff]
        %v1499 = vld [vmem:[%s15 + $0x20] sm:$0xff]
        %v1500 = vld [vmem:[%s15 + $0x28] sm:$0xff]
        %v1501 = vld [vmem:[%s15 + $0x30] sm:$0xff]
        %v1502 = vld [vmem:[%s15 + $0x38] sm:$0xff]
        %v1503 = vld [vmem:[#allocation7] sm:$0x1]
        %v1505 = vlaneseq
        %v1506 = vshrl.u32 %v1505, 7
        %v1507 = vsub.s32 0, %v1506
        %v1508 = vrot.slane %v1503, %v1507
        %v1511 = vsel %vm740, %v1494, 0
        %1513 = vmatprep.subr.mxu0 0.0
        %1514 = vmatpush1.msra.mxu0 0.0
        %1515 = vmatprep.subr.mxu0 0.0
        %1516 = vmatpush1.msra.mxu0 0.0
        %1517 = vmatprep.subr.mxu0 0.0
        %1518 = vmatpush1.msra.mxu0 0.0
        %1519 = vmatprep.subr.mxu0 0.0
        %1520 = vmatpush1.msra.mxu0 0.0
        %1521 = vmatprep.subr.mxu0 0.0
        %1522 = vmatpush1.msra.mxu0 0.0
        %1523 = vmatprep.subr.mxu0 0.0
        %1524 = vmatpush1.msra.mxu0 0.0
        %1525 = vmatprep.subr.mxu0 0.0
        %1526 = vmatpush1.msra.mxu0 0.0
        %1527 = vmatprep.subr.mxu0 0.0
        %1528 = vmatpush1.msra.mxu0 0.0
        %1529 = vmatprep.subr.mxu0 0.0
        %1530 = vmatpush1.msra.mxu0 %v1502
        %1531 = vmatprep.subr.mxu0 0.0
        %1532 = vmatpush1.msra.mxu0 %v1501
        %1533 = vmatprep.subr.mxu0 0.0
        %1534 = vmatpush1.msra.mxu0 %v1500
        %1535 = vmatprep.subr.mxu0 0.0
        %1536 = vmatpush1.msra.mxu0 %v1499
        %1537 = vmatprep.subr.mxu0 0.0
        %1538 = vmatpush1.msra.mxu0 %v1498
        %1539 = vmatprep.subr.mxu0 0.0
        %1540 = vmatpush1.msra.mxu0 %v1497
        %1541 = vmatprep.subr.mxu0 0.0
        %1542 = vmatpush1.msra.mxu0 %v1496
        %1543 = vmatprep.subr.mxu0 0.0
        %1544 = vmatpush1.msra.mxu0 %v1495
        %1545 = vmatprep.subr.mxu0 0.0
        %1546 = vmatpush2.msra.mxu0 0.0
        %1547 = vmatprep.subr.mxu0 0.0
        %1548 = vmatpush2.msra.mxu0 0.0
        %1549 = vmatprep.subr.mxu0 0.0
        %1550 = vmatpush2.msra.mxu0 0.0
        %1551 = vmatprep.subr.mxu0 0.0
        %1552 = vmatpush2.msra.mxu0 0.0
        %1553 = vmatprep.subr.mxu0 0.0
        %1554 = vmatpush2.msra.mxu0 0.0
        %1555 = vmatprep.subr.mxu0 0.0
        %1556 = vmatpush2.msra.mxu0 0.0
        %1557 = vmatprep.subr.mxu0 0.0
        %1558 = vmatpush2.msra.mxu0 0.0
        %1559 = vmatprep.subr.mxu0 0.0
        %1560 = vmatpush2.msra.mxu0 0.0
        %1561 = vmatprep.subr.mxu0 0.0
        %1562 = vmatpush2.msra.mxu0 0.0
        %1563 = vmatprep.subr.mxu0 0.0
        %1564 = vmatpush2.msra.mxu0 0.0
        %1565 = vmatprep.subr.mxu0 0.0
        %1566 = vmatpush2.msra.mxu0 0.0
        %1567 = vmatprep.subr.mxu0 0.0
        %1568 = vmatpush2.msra.mxu0 0.0
        %1569 = vmatprep.subr.mxu0 0.0
        %1570 = vmatpush2.msra.mxu0 0.0
        %1571 = vmatprep.subr.mxu0 0.0
        %1572 = vmatpush2.msra.mxu0 0.0
        %1573 = vmatprep.subr.mxu0 0.0
        %1574 = vmatpush2.msra.mxu0 0.0
        %1575 = vmatprep.subr.mxu0 0.0
        %1576 = vmatpush2.msra.mxu0 0.0
        %1577 = vmatprep.mubr.f32.mxu0 0.0
        %1578 = vmatmul.mubr.f32.gmra.mxu0 %v1511
        %v1579 = vpop.f32.mrf.mxu0
        %v1580 = vadd.f32 %v1508, %v1579
        %v1581 = vpop.f32.mrf.mxu0
        %1582 = vdwg.mxu0
        %v1584 = vrot.slane %v1580, 1
        %v1587 = vadd.f32 %v1397, %v1580
        %v1588 = vadd.f32 %v1398, %v1584
        %v1591 = vrot.slane %v1588, 7
        %v1592 = vsel %vm832, %v1591, %v1587
        %v1594 = vsel %vm1350, %v1592, 0.0
        %1595 = vadd.xlane.f32.xlu0 %v1594
        %v1596 = vpop.xlane.xlu0 %1595
        %v1597 = vmul.f32 %v1596, %v1354
        %v1599 = vrot.slane %v1597, 1
        %v1602 = vsub.f32 %v1587, %v1597
        %v1603 = vsub.f32 %v1588, %v1599
        %v1604 = vmul.f32 %v1602, %v1602
        %v1605 = vmul.f32 %v1603, %v1603
        %v1608 = vrot.slane %v1605, 7
        %v1609 = vsel %vm832, %v1608, %v1604
        %v1611 = vsel %vm1350, %v1609, 0.0
        %1612 = vadd.xlane.f32.xlu0 %v1611
        %v1613 = vpop.xlane.xlu0 %1612
        %v1614 = vmul.f32 %v1613, %v1354
        %v1615 = vadd.f32 %v1614, 1e-05
        %v1616 = vrsqrt.pop %v1615
        %v1618 = vrot.slane %v1616, 1
        %v1621 = vmul.f32 %v1602, %v1616
        %v1622 = vmul.f32 %v1603, %v1618
        %v1623 = vld [vmem:[%s17] sm:$0x1]
        %v1625 = vlaneseq
        %v1626 = vshrl.u32 %v1625, 7
        %v1627 = vsub.s32 0, %v1626
        %v1628 = vrot.slane %v1623, %v1627
        %v1630 = vmul.f32 %v1621, %v1628
        %v1631 = vmul.f32 %v1622, %v1628
        %v1632 = vld [vmem:[%s18] sm:$0x1]
        %v1634 = vlaneseq
        %v1635 = vshrl.u32 %v1634, 7
        %v1636 = vsub.s32 0, %v1635
        %v1637 = vrot.slane %v1632, %v1636
        %v1639 = vadd.f32 %v1630, %v1637
        %v1640 = vadd.f32 %v1631, %v1637
        %v1641 = vld [vmem:[%s697] sm:$0x1]
        %v1642 = vmul.f32 %v1639, %v1640
        %vm1643 = vcmask 253952
        %v1644 = vsel %vm1643, %v1642, 0.0
        %1645 = vadd.xlane.f32.xlu0 %v1644
        %v1646 = vpop.xlane.xlu0 %1645
        %v1647 = vmul.f32 %v1639, %v1639
        %v1648 = vsel %vm1643, %v1647, 0.0
        %1649 = vadd.xlane.f32.xlu0 %v1648
        %v1650 = vpop.xlane.xlu0 %1649
        %v1651 = vrsqrt.pop %v1650
        %v1652 = vmul.f32 %v1650, %v1651
        %vm1653 = vcmp.eq.f32.partialorder %v1650, inf
        %v1654 = vsel %vm1653, %v1650, %v1652
        %vm1655 = vcmp.eq.f32.partialorder %v1650, 0.0
        %v1656 = vand.u32 %v1650, 2147483648
        %v1657 = vsel %vm1655, %v1656, %v1654
        %v1658 = vmul.f32 %v1640, %v1640
        %v1659 = vsel %vm1643, %v1658, 0.0
        %1660 = vadd.xlane.f32.xlu0 %v1659
        %v1661 = vpop.xlane.xlu0 %1660
        %v1662 = vrsqrt.pop %v1661
        %v1663 = vmul.f32 %v1661, %v1662
        %vm1664 = vcmp.eq.f32.partialorder %v1661, inf
        %v1665 = vsel %vm1664, %v1661, %v1663
        %vm1666 = vcmp.eq.f32.partialorder %v1661, 0.0
        %v1667 = vand.u32 %v1661, 2147483648
        %v1668 = vsel %vm1666, %v1667, %v1665
        %v1669 = vmul.f32 %v1657, %v1668
        %v1670 = vmax.f32 %v1669, 1e-08
        %v1671 = vrcp.pop %v1670
        %v1672 = vmul.f32 %v1646, %v1671
        %v1673 = vadd.f32 %v1672, 1.0
        %v1674 = vmul.f32 %v1673, 0.5
        %v1675 = vsub.f32 %v1674, %v1641
        %v1676 = vmul.f32 %v1675, %v1675
        %v1677 = vsel %vm708, %v1672, 0.0
        %v1678 = vsel %vm708, %v1676, 0.0
        %vm1679 = vcmp.eq.s32.totalorder %v725, 0
        %vm1680 = vcmp.eq.s32.totalorder %v725, 1
        %1682 = vset.pattern.permute.xlu0 0
        %1683 = vperm.xlu0 %1682, %v1678
        %v1684 = vpop.permute.xlu0 %1683
        %v1686 = vsel %vm1680, %v1684, 0.0
        %1688 = vset.pattern.permute.xlu0 0
        %1689 = vperm.xlu0 %1688, %v1677
        %v1690 = vpop.permute.xlu0 %1689
        %v1692 = vsel %vm1679, %v1690, %v1686
        %1693 = vst [vmem:[%s701] sm:$0xff] %v1692
        %p1694 = scmp.lt.s32.totalorder %s33, 1
        %s1695 = scalar_select %p1694, %s33, 1
        %s1696 = smul.addr %s1695, 8
        %s1697 = scalar_lea.vmem %s19, %s1696
        // Predicated region
        $region113: #{siamese_forward.1} parent=95 // pred_check
          %p1698 = pneg %p475
        $region114: #{siamese_forward.1} parent=95 // pred_check_branch
          %1700 = sbr.rel (%p1698) target = $region116
        $region115: #{siamese_forward.1} parent=95 // pred_region
          _
        $region116: #{siamese_forward.1} parent=95 // pred_fallthru
          _
      $region96: #{siamese_forward.1} parent=5 // pred_fallthru
        _
      %p1701 = scmp.le.s32.totalorder 2, %s28
      // Predicated region
      $region117: #{siamese_forward.1} parent=5 // pred_check
        %p1702 = pneg %p1701
      $region118: #{siamese_forward.1} parent=5 // pred_check_branch
        %1704 = sbr.rel (%p1702) target = $region120
      $region119: #{siamese_forward.1} parent=5 // pred_region
        %s1705 = ssub.s32 %s28, 2
        // Predicated region
        $region121: #{siamese_forward.1} parent=119 // pred_check
          %p1706 = pneg %p481
        $region122: #{siamese_forward.1} parent=119 // pred_check_branch
          %1708 = sbr.rel (%p1706) target = $region124
        $region123: #{siamese_forward.1} parent=119 // pred_region
          %p1709 = scmp.lt.s32.totalorder %s34, 1
          %s1710 = scalar_select %p1709, %s34, 1
          %s1711 = smul.addr %s1710, 8
          %s1712 = scalar_lea.vmem %s19, %s1711
        $region124: #{siamese_forward.1} parent=119 // pred_fallthru
          _
      $region120: #{siamese_forward.1} parent=5 // pred_fallthru
        _
    $region6: #{siamese_forward.1} parent=1 // loop_footer
      %s32 = sadd.s32 1, %s28
    $region7: #{siamese_forward.1} parent=1 // loop_footer_branch
      %27 = sbr.rel target = $region3
    $region8: #{siamese_forward.1} parent=1 // loop_exit
      _
    %1713 = vsyncpa [#allocation3], 1
    %s1714 = scalar_lea.sflag [#allocation3], 1
    %1715 = vsyncpa %s1714, 1
    %1716 = vsyncpa [#allocation5], 1
    %1717 = vsyncpa [#allocation8], 1

</llo_original>
